<compile_context>
chip_gen: v7x
topology: tpu7x:2x2x1
jax: 0.10.0
libtpu: 0.0.40
codegen_flags: <defaults>
</compile_context>

<pallas_src>
import functools

import jax
import jax.numpy as jnp
import numpy as np
from jax import lax
from jax.experimental import pallas as pl
from jax.experimental.pallas import tpu as pltpu

LANE = 128


def _vmem_limit_bytes():
    """Generation-dependent VMEM budget: ~75% of physical VMEM (96 MiB on v5e/v6e,
    48 MiB on v7x).  Conservative 48 MiB fallback if the query is unavailable."""
    cap = 64 * 1024 * 1024
    try:
        info = pltpu.get_tpu_info()
        cap = int(getattr(info, "vmem_capacity_bytes", cap) or cap)
    except Exception:
        pass
    return (cap * 3) // 4


VMEM_LIMIT = _vmem_limit_bytes()


# ---------------------------------------------------------------------------
# small helpers
# ---------------------------------------------------------------------------

def _round_up(x, m):
    return ((x + m - 1) // m) * m


def _pick_tile(n_pad, target):
    """Largest multiple of 128 <= target that divides n_pad (n_pad is a mult of 128)."""
    t = max(LANE, (min(target, n_pad) // LANE) * LANE)
    while n_pad % t:
        t -= LANE
    return t


def _pad2(a, rows, cols, dtype):
    out = jnp.zeros((rows, cols), dtype)
    return out.at[: a.shape[0], : a.shape[1]].set(a.astype(dtype))


# ---------------------------------------------------------------------------
# Fully-fused kernel (small graphs: everything VMEM-resident, single launch)
# ---------------------------------------------------------------------------

def _fused_kernel(x_ref, adj_ref, *refs, n_enc, n_gcn, n_dec):
    """refs = enc(w,b)*n_enc + gcn(w,b)*n_gcn + dec(w,b)*n_dec
              + [a_z_out, s_z_out, a_recon_out, s_recon_out]"""
    p = 0
    enc = refs[p:p + 2 * n_enc]; p += 2 * n_enc
    gcn = refs[p:p + 2 * n_gcn]; p += 2 * n_gcn
    dec = refs[p:p + 2 * n_dec]; p += 2 * n_dec
    a_z_ref, s_z_ref, a_recon_ref, s_recon_ref = refs[p:p + 4]

    x = x_ref[...]                          # bf16 [N_p, F_p]
    adj = adj_ref[...]                      # bf16 [N_p, N_p]

    def mlp(layers, h, out_ref):
        n = len(layers) // 2
        y = None
        for l in range(n):
            w = layers[2 * l][...]
            b = layers[2 * l + 1][...]
            y = jnp.dot(h, w, preferred_element_type=jnp.float32) + b
            if l < n - 1:
                h = jnp.maximum(y, 0.0).astype(jnp.bfloat16)
            else:
                out_ref[...] = y
        return y

    # A-encoder MLP
    a_z = mlp(enc, x, a_z_ref)

    # S-encoder GCN: h <- Ahat @ (h @ W) + b, ReLU on all but the last layer
    hg = x
    s_z = None
    for l in range(n_gcn):
        w = gcn[2 * l][...]
        b = gcn[2 * l + 1][...]
        hw = jnp.dot(hg, w, preferred_element_type=jnp.float32).astype(jnp.bfloat16)
        agg = jnp.dot(adj, hw, preferred_element_type=jnp.float32) + b
        if l < n_gcn - 1:
            hg = jnp.maximum(agg, 0.0).astype(jnp.bfloat16)
        else:
            s_z = agg
    s_z_ref[...] = s_z

    # Z = A_z + S_z, A-decoder MLP
    z = (a_z + s_z).astype(jnp.bfloat16)
    mlp(dec, z, a_recon_ref)

    # Inner-product decoder: sigmoid(S_z @ S_z^T)   (contract feature dim directly)
    s_bf = s_z.astype(jnp.bfloat16)
    logits = lax.dot_general(s_bf, s_bf, (((1,), (1,)), ((), ())),
                             preferred_element_type=jnp.float32)
    s_recon_ref[...] = jax.nn.sigmoid(logits)


def _fused_call(x_p, adj_p, enc, gcn, dec):
    N_p, F_p = x_p.shape
    C_p = enc[-1][0].shape[1]
    F_out_p = dec[-1][0].shape[1]

    args = [x_p, adj_p]
    for blk in (enc, gcn, dec):
        for w, b in blk:
            args += [w, b]
    vmem = pl.BlockSpec(memory_space=pltpu.MemorySpace.VMEM)

    flops = 2 * N_p * N_p * C_p                      # inner product
    for blk, din0 in ((enc, F_p), (gcn, F_p), (dec, C_p)):
        d = din0
        for w, _ in blk:
            flops += 2 * N_p * d * w.shape[1]
            d = w.shape[1]
    flops += 2 * len(gcn) * N_p * N_p * C_p          # SpMM aggregations (upper bound)

    return pl.pallas_call(
        functools.partial(_fused_kernel, n_enc=len(enc), n_gcn=len(gcn),
                          n_dec=len(dec)),
        out_shape=(jax.ShapeDtypeStruct((N_p, C_p), jnp.float32),
                   jax.ShapeDtypeStruct((N_p, C_p), jnp.float32),
                   jax.ShapeDtypeStruct((N_p, F_out_p), jnp.float32),
                   jax.ShapeDtypeStruct((N_p, N_p), jnp.float32)),
        in_specs=[vmem] * len(args),
        out_specs=(vmem, vmem, vmem, vmem),
        compiler_params=pltpu.CompilerParams(vmem_limit_bytes=VMEM_LIMIT),
        cost_estimate=pl.CostEstimate(
            flops=int(flops), transcendentals=int(N_p * N_p),
            bytes_accessed=int(2 * N_p * N_p + 2 * N_p * F_p + 4 * N_p * N_p
                               + 8 * N_p * C_p + 4 * N_p * F_out_p)),
    )(*args)


# ---------------------------------------------------------------------------
# Tiled-path kernels (large graphs)
# ---------------------------------------------------------------------------

def _encode_kernel(x_ref, *refs, n_enc):
    """Node-wise fused kernel: full A-encoder MLP + GCN layer-0 feature transform.
    refs = enc(w,b)*n_enc + [w_gcn0, a_z_out, xw0_out]"""
    enc = refs[: 2 * n_enc]
    w_gcn0_ref = refs[2 * n_enc]
    a_z_ref = refs[2 * n_enc + 1]
    xw0_ref = refs[2 * n_enc + 2]

    x = x_ref[...]
    h = x
    for l in range(n_enc):
        w = enc[2 * l][...]
        b = enc[2 * l + 1][...]
        y = jnp.dot(h, w, preferred_element_type=jnp.float32) + b
        if l < n_enc - 1:
            h = jnp.maximum(y, 0.0).astype(jnp.bfloat16)
        else:
            a_z_ref[...] = y

    xw0_ref[...] = jnp.dot(
        x, w_gcn0_ref[...], preferred_element_type=jnp.float32).astype(jnp.bfloat16)


def _encode_call(x_p, enc_params, w_gcn0, *, tm):
    N_p, F_p = x_p.shape
    C_p = enc_params[-1][0].shape[1]
    H0_p = w_gcn0.shape[1]

    in_specs = [pl.BlockSpec((tm, F_p), lambda i: (i, 0))]
    args = [x_p]
    for w, b in enc_params:
        in_specs.append(pl.BlockSpec(w.shape, lambda i: (0, 0)))
        in_specs.append(pl.BlockSpec(b.shape, lambda i: (0, 0)))
        args += [w, b]
    in_specs.append(pl.BlockSpec(w_gcn0.shape, lambda i: (0, 0)))
    args.append(w_gcn0)

    flops = 2 * N_p * F_p * H0_p
    d_prev = F_p
    for w, _ in enc_params:
        flops += 2 * N_p * d_prev * w.shape[1]
        d_prev = w.shape[1]

    return pl.pallas_call(
        functools.partial(_encode_kernel, n_enc=len(enc_params)),
        out_shape=(jax.ShapeDtypeStruct((N_p, C_p), jnp.float32),
                   jax.ShapeDtypeStruct((N_p, H0_p), jnp.bfloat16)),
        grid_spec=pltpu.PrefetchScalarGridSpec(
            num_scalar_prefetch=0,
            grid=(N_p // tm,),
            in_specs=in_specs,
            out_specs=(pl.BlockSpec((tm, C_p), lambda i: (i, 0)),
                       pl.BlockSpec((tm, H0_p), lambda i: (i, 0)))),
        compiler_params=pltpu.CompilerParams(
            dimension_semantics=("parallel",),
            vmem_limit_bytes=VMEM_LIMIT),
        cost_estimate=pl.CostEstimate(
            flops=int(flops), transcendentals=0,
            bytes_accessed=int(2 * N_p * F_p + 4 * N_p * C_p + 2 * N_p * H0_p)),
    )(*args)


def _gcn_mid_kernel(adj_ref, hw_ref, b_ref, w_next_ref, hw_next_ref, acc_ref,
                    *, tk, hw_resident):
    """Intermediate GraphConv: H = ReLU(Ahat @ HW + b); epilogue fuses H @ W_next.
    NOTE: reduction axis (grid axis 1) must stay last + 'arbitrary'."""
    k = pl.program_id(1)

    @pl.when(k == 0)
    def _():
        acc_ref[...] = jnp.zeros_like(acc_ref)

    if hw_resident:
        off = pl.multiple_of(k * tk, LANE)
        hw_k = hw_ref[pl.ds(off, tk), :]
    else:
        hw_k = hw_ref[...]

    acc_ref[...] += jnp.dot(adj_ref[...], hw_k, preferred_element_type=jnp.float32)

    @pl.when(k == pl.num_programs(1) - 1)
    def _():
        h = jnp.maximum(acc_ref[...] + b_ref[...], 0.0).astype(jnp.bfloat16)
        hw_next_ref[...] = jnp.dot(
            h, w_next_ref[...], preferred_element_type=jnp.float32).astype(jnp.bfloat16)


def _gcn_mid_call(adj_p, hw, b, w_next, *, tm, tk):
    N_p = adj_p.shape[0]
    d_in = hw.shape[1]
    d_out = w_next.shape[1]

    # hw VMEM-resident when it fits: DMA'd once per kernel (constant block index),
    # sliced per k-step in the kernel -> no per-row-tile re-stream from HBM.
    hw_resident = (N_p * d_in * 2) <= (VMEM_LIMIT // 4)
    hw_spec = (pl.BlockSpec((N_p, d_in), lambda i, k: (0, 0)) if hw_resident
               else pl.BlockSpec((tk, d_in), lambda i, k: (k, 0)))

    return pl.pallas_call(
        functools.partial(_gcn_mid_kernel, tk=tk, hw_resident=hw_resident),
        out_shape=jax.ShapeDtypeStruct((N_p, d_out), jnp.bfloat16),
        grid_spec=pltpu.PrefetchScalarGridSpec(
            num_scalar_prefetch=0,
            grid=(N_p // tm, N_p // tk),     # reduction axis LAST (required)
            in_specs=[pl.BlockSpec((tm, tk), lambda i, k: (i, k)),
                      hw_spec,
                      pl.BlockSpec((1, d_in), lambda i, k: (0, 0)),
                      pl.BlockSpec((d_in, d_out), lambda i, k: (0, 0))],
            out_specs=pl.BlockSpec((tm, d_out), lambda i, k: (i, 0)),
            scratch_shapes=[pltpu.VMEM((tm, d_in), jnp.float32)]),
        compiler_params=pltpu.CompilerParams(
            dimension_semantics=("parallel", "arbitrary"),
            vmem_limit_bytes=VMEM_LIMIT),
        cost_estimate=pl.CostEstimate(
            flops=int(2 * N_p * N_p * d_in + 2 * N_p * d_in * d_out),
            transcendentals=0,
            bytes_accessed=int(2 * N_p * N_p + 2 * N_p * d_in + 2 * N_p * d_out)),
    )(adj_p, hw, b, w_next)


def _gcn_last_kernel(adj_ref, hw_ref, b_ref, a_z_ref, *refs, n_dec, tk, hw_resident):
    """Last GraphConv (no activation) fused with Z = A_z + S_z and the A-decoder MLP.
    Emits S_z in f32 (module output) and bf16 (inner-product operand).
    refs = dec(w,b)*n_dec + [s_z_out, s_z_bf16_out, a_recon_out, acc_scratch]"""
    dec = refs[: 2 * n_dec]
    s_z_ref = refs[2 * n_dec]
    s_z_bf_ref = refs[2 * n_dec + 1]
    a_recon_ref = refs[2 * n_dec + 2]
    acc_ref = refs[2 * n_dec + 3]

    k = pl.program_id(1)

    @pl.when(k == 0)
    def _():
        acc_ref[...] = jnp.zeros_like(acc_ref)

    if hw_resident:
        off = pl.multiple_of(k * tk, LANE)
        hw_k = hw_ref[pl.ds(off, tk), :]
    else:
        hw_k = hw_ref[...]

    acc_ref[...] += jnp.dot(adj_ref[...], hw_k, preferred_element_type=jnp.float32)

    @pl.when(k == pl.num_programs(1) - 1)
    def _():
        s_z = acc_ref[...] + b_ref[...]                 # last GCN layer: no ReLU
        s_z_ref[...] = s_z
        s_z_bf_ref[...] = s_z.astype(jnp.bfloat16)      # bf16 handoff for K4
        h = (a_z_ref[...] + s_z).astype(jnp.bfloat16)   # Z = A_z + S_z
        for l in range(n_dec):
            w = dec[2 * l][...]
            b = dec[2 * l + 1][...]
            y = jnp.dot(h, w, preferred_element_type=jnp.float32) + b
            if l < n_dec - 1:
                h = jnp.maximum(y, 0.0).astype(jnp.bfloat16)
            else:
                a_recon_ref[...] = y


def _gcn_last_call(adj_p, hw, b, a_z, dec_params, *, tm, tk):
    N_p = adj_p.shape[0]
    C_p = hw.shape[1]
    F_out_p = dec_params[-1][0].shape[1]

    hw_resident = (N_p * C_p * 2) <= (VMEM_LIMIT // 4)
    hw_spec = (pl.BlockSpec((N_p, C_p), lambda i, k: (0, 0)) if hw_resident
               else pl.BlockSpec((tk, C_p), lambda i, k: (k, 0)))

    in_specs = [pl.BlockSpec((tm, tk), lambda i, k: (i, k)),
                hw_spec,
                pl.BlockSpec((1, C_p), lambda i, k: (0, 0)),
                pl.BlockSpec((tm, C_p), lambda i, k: (i, 0))]
    args = [adj_p, hw, b, a_z]
    for w, bb in dec_params:
        in_specs.append(pl.BlockSpec(w.shape, lambda i, k: (0, 0)))
        in_specs.append(pl.BlockSpec(bb.shape, lambda i, k: (0, 0)))
        args += [w, bb]

    flops = 2 * N_p * N_p * C_p
    d_prev = C_p
    for w, _ in dec_params:
        flops += 2 * N_p * d_prev * w.shape[1]
        d_prev = w.shape[1]

    return pl.pallas_call(
        functools.partial(_gcn_last_kernel, n_dec=len(dec_params), tk=tk,
                          hw_resident=hw_resident),
        out_shape=(jax.ShapeDtypeStruct((N_p, C_p), jnp.float32),
                   jax.ShapeDtypeStruct((N_p, C_p), jnp.bfloat16),
                   jax.ShapeDtypeStruct((N_p, F_out_p), jnp.float32)),
        grid_spec=pltpu.PrefetchScalarGridSpec(
            num_scalar_prefetch=0,
            grid=(N_p // tm, N_p // tk),     # reduction axis LAST (required)
            in_specs=in_specs,
            out_specs=(pl.BlockSpec((tm, C_p), lambda i, k: (i, 0)),
                       pl.BlockSpec((tm, C_p), lambda i, k: (i, 0)),
                       pl.BlockSpec((tm, F_out_p), lambda i, k: (i, 0))),
            scratch_shapes=[pltpu.VMEM((tm, C_p), jnp.float32)]),
        compiler_params=pltpu.CompilerParams(
            dimension_semantics=("parallel", "arbitrary"),
            vmem_limit_bytes=VMEM_LIMIT),
        cost_estimate=pl.CostEstimate(
            flops=int(flops), transcendentals=0,
            bytes_accessed=int(2 * N_p * N_p + 2 * N_p * C_p + 4 * N_p * C_p
                               + 10 * N_p * C_p + 4 * N_p * F_out_p)),
    )(*args)


def _inner_product_kernel(zq_ref, zk_ref, out_ref):
    """S_recon tile = sigmoid(z_q @ z_k^T); operands already bf16, contract feature dim."""
    logits = lax.dot_general(zq_ref[...], zk_ref[...], (((1,), (1,)), ((), ())),
                             preferred_element_type=jnp.float32)
    out_ref[...] = jax.nn.sigmoid(logits)


def _inner_product_call(s_z_bf, *, tq, tkj):
    N_p, C_p = s_z_bf.shape
    return pl.pallas_call(
        _inner_product_kernel,
        out_shape=jax.ShapeDtypeStruct((N_p, N_p), jnp.float32),
        grid_spec=pltpu.PrefetchScalarGridSpec(
            num_scalar_prefetch=0,
            grid=(N_p // tq, N_p // tkj),
            in_specs=[pl.BlockSpec((tq, C_p), lambda qi, kj: (qi, 0)),
                      pl.BlockSpec((tkj, C_p), lambda qi, kj: (kj, 0))],
            out_specs=pl.BlockSpec((tq, tkj), lambda qi, kj: (qi, kj))),
        compiler_params=pltpu.CompilerParams(
            dimension_semantics=("parallel", "parallel"),
            vmem_limit_bytes=VMEM_LIMIT),
        cost_estimate=pl.CostEstimate(
            flops=int(2 * N_p * N_p * C_p),
            transcendentals=int(N_p * N_p),
            bytes_accessed=int(4 * N_p * N_p + 4 * N_p * C_p)),
    )(s_z_bf, s_z_bf)


# ---------------------------------------------------------------------------
# SVDAE forward (Pallas path)
# ---------------------------------------------------------------------------

def _fused_footprint_bytes(N_p, F_p, H_max, C_p, F_out_p):
    return (2 * N_p * N_p + 8 * N_p * N_p          # adj bf16, logits + S_recon f32
            + 2 * N_p * F_p + 4 * N_p * F_out_p    # x bf16, A_recon f32
            + 12 * N_p * C_p + 8 * N_p * H_max)    # A_z/S_z/temps, hidden activations


def svdae_forward_pallas(params_p, adj_p, x_p, *, force_tiled=False):
    enc = params_p["A_encoder"]
    dec = params_p["A_decoder"]
    gcn = params_p["S_encoder"]

    N_p, F_p = x_p.shape
    C_p = enc[-1][0].shape[1]
    F_out_p = dec[-1][0].shape[1]
    H_max = max(w.shape[1] for w, _ in (list(enc) + list(gcn) + list(dec)))

    # --- small graphs: single fully-fused kernel (1 launch, adjacency read once) ---
    if (not force_tiled and
            _fused_footprint_bytes(N_p, F_p, H_max, C_p, F_out_p) <= VMEM_LIMIT // 2):
        return _fused_call(x_p, adj_p, enc, gcn, dec)

    # --- large graphs: tiled multi-kernel path ---
    # tm capped so the 'parallel' row axis keeps >= 4 steps (v7x 2-TC split).
    tm = _pick_tile(N_p, max(LANE, min(1024, N_p // 4)))
    tk = _pick_tile(N_p, 1024)     # adjacency-column / reduction tile (last, "arbitrary")
    tq = _pick_tile(N_p, 512)      # inner-product row tile
    tkj = _pick_tile(N_p, 2048)    # inner-product col tile (lane-dense output)

    # K1: fused A-encoder MLP + GCN layer-0 feature transform (node-wise).
    a_z, hw = _encode_call(x_p, enc, gcn[0][0], tm=tm)

    # K2..: intermediate GraphConv aggregations; next-layer transform fused in epilogue.
    for l in range(len(gcn) - 1):
        hw = _gcn_mid_call(adj_p, hw, gcn[l][1], gcn[l + 1][0], tm=tm, tk=tk)

    # K3: final GraphConv aggregation + fused (A_z + S_z) + full A-decoder MLP.
    s_z, s_z_bf, a_recon = _gcn_last_call(adj_p, hw, gcn[-1][1], a_z, dec, tm=tm, tk=tk)

    # K4: inner-product decoder on the bf16 S_z handoff.
    s_recon = _inner_product_call(s_z_bf, tq=tq, tkj=tkj)

    return a_z, s_z, a_recon, s_recon


# ---------------------------------------------------------------------------
# Parameter construction + padding
# ---------------------------------------------------------------------------

def _init_linear(key, fan_in, fan_out):
    kw, kb = jax.random.split(key)
    bound = 1.0 / np.sqrt(fan_in)
    w = jax.random.uniform(kw, (fan_in, fan_out), jnp.float32, -bound, bound)
    b = jax.random.uniform(kb, (fan_out,), jnp.float32, -bound, bound)
    return w, b


def make_block_params(key, in_feats, n_hidden, n_classes, n_layers):
    dims = [in_feats] + [n_hidden] * n_layers + [n_classes]
    params = []
    for i in range(len(dims) - 1):
        key, sub = jax.random.split(key)
        params.append(_init_linear(sub, dims[i], dims[i + 1]))
    return params


def pad_block_params(params):
    """Zero-pad weights to 128-multiples (bf16 MXU operands); biases -> (1, d_p) f32."""
    out = []
    for w, b in params:
        di = _round_up(w.shape[0], LANE)
        do = _round_up(w.shape[1], LANE)
        w_p = _pad2(w, di, do, jnp.bfloat16)
        b_p = jnp.zeros((1, do), jnp.float32).at[0, : b.shape[0]].set(b)
        out.append((w_p, b_p))
    return out


# ---------------------------------------------------------------------------
# References
# ---------------------------------------------------------------------------

def _ref_mlp_padded(params_p, h_bf16):
    h, out = h_bf16, None
    for l, (w, b) in enumerate(params_p):
        y = jnp.dot(h, w, preferred_element_type=jnp.float32) + b
        if l < len(params_p) - 1:
            h = jnp.maximum(y, 0.0).astype(jnp.bfloat16)
        else:
            out = y
    return out


def _ref_forward_padded(params_p, adj_p, x_p):
    """Mirrors the kernel arithmetic exactly (bf16 MXU inputs, f32 accumulation)."""
    a_z = _ref_mlp_padded(params_p["A_encoder"], x_p)
    gcn = params_p["S_encoder"]
    hw = jnp.dot(x_p, gcn[0][0], preferred_element_type=jnp.float32).astype(jnp.bfloat16)
    for l in range(len(gcn) - 1):
        agg = jnp.dot(adj_p, hw, preferred_element_type=jnp.float32)
        h = jnp.maximum(agg + gcn[l][1], 0.0).astype(jnp.bfloat16)
        hw = jnp.dot(h, gcn[l + 1][0], preferred_element_type=jnp.float32).astype(jnp.bfloat16)
    s_z = jnp.dot(adj_p, hw, preferred_element_type=jnp.float32) + gcn[-1][1]
    z = (a_z + s_z).astype(jnp.bfloat16)
    a_recon = _ref_mlp_padded(params_p["A_decoder"], z)
    s_bf = s_z.astype(jnp.bfloat16)
    s_recon = jax.nn.sigmoid(lax.dot_general(
        s_bf, s_bf, (((1,), (1,)), ((), ())), preferred_element_type=jnp.float32))
    return a_z, s_z, a_recon, s_recon


def _ref_mlp_f32(params, x):
    h = x
    for i, (w, b) in enumerate(params):
        h = h @ w + b
        if i != len(params) - 1:
            h = jnp.maximum(h, 0.0)
    return h


def _ref_gcn_f32(params, adj, x):
    h = x
    for i, (w, b) in enumerate(params):
        h = adj @ (h @ w) + b
        if i != len(params) - 1:
            h = jnp.maximum(h, 0.0)
    return h


def _ref_forward_f32(params, adj, x):
    A_z = _ref_mlp_f32(params["A_encoder"], x)
    S_z = _ref_gcn_f32(params["S_encoder"], adj, x)
    A_recon = _ref_mlp_f32(params["A_decoder"], A_z + S_z)
    S_recon = jax.nn.sigmoid(S_z @ S_z.T)
    return A_z, S_z, A_recon, S_recon


# ---------------------------------------------------------------------------
# Main
# ---------------------------------------------------------------------------

def _make_inputs(key, N, in_feats):
    k_feat, k_adj = jax.random.split(key)
    features = jax.random.normal(k_feat, (N, in_feats), jnp.float32)
    # Symmetric random graph; normalized adjacency  Ahat = D^{-1/2} (A + I) D^{-1/2}
    a_rand = (jax.random.uniform(k_adj, (N, N)) > 0.6).astype(jnp.float32)
    a_sym = jnp.clip(a_rand + a_rand.T, 0.0, 1.0)
    a_hat = a_sym + jnp.eye(N, dtype=jnp.float32)
    d_inv_sqrt = 1.0 / jnp.sqrt(a_hat.sum(axis=1))
    adj_norm = a_hat * d_inv_sqrt[:, None] * d_inv_sqrt[None, :]
    return features, adj_norm


if __name__ == "__main__":
    def run_case(seed, N, in_feats, n_hidden, n_classes, n_layers,
                 force_tiled, check_f32):
        key = jax.random.PRNGKey(seed)
        k_in, k_aenc, k_adec, k_senc = jax.random.split(key, 4)
        features, adj_norm = _make_inputs(k_in, N, in_feats)
        params = {
            "A_encoder": make_block_params(k_aenc, in_feats, n_hidden, n_classes, n_layers),
            "A_decoder": make_block_params(k_adec, n_classes, n_hidden, in_feats, n_layers),
            "S_encoder": make_block_params(k_senc, in_feats, n_hidden, n_classes, n_layers),
        }

        # Pad to lane-dense (128-multiple) shapes; bf16 MXU operands.
        N_p = _round_up(N, LANE)
        F_p = _round_up(in_feats, LANE)
        x_p = _pad2(features, N_p, F_p, jnp.bfloat16)
        adj_p = _pad2(adj_norm, N_p, N_p, jnp.bfloat16)
        params_p = {k: pad_block_params(v) for k, v in params.items()}

        fwd = jax.jit(functools.partial(svdae_forward_pallas, force_tiled=force_tiled))
        a_z_p, s_z_p, a_recon_p, s_recon_p = jax.block_until_ready(
            fwd(params_p, adj_p, x_p))

        A_z = np.asarray(a_z_p[:N, :n_classes])
        S_z = np.asarray(s_z_p[:N, :n_classes])
        A_recon = np.asarray(a_recon_p[:N, :in_feats])
        S_recon = np.asarray(s_recon_p[:N, :N])

        assert A_z.shape == (N, n_classes)
        assert S_z.shape == (N, n_classes)
        assert A_recon.shape == (N, in_feats)
        assert S_recon.shape == (N, N)

        # 1) Strict check: reference mirroring the kernel's bf16-MXU / f32-accum math.
        refs_p = _ref_forward_padded(params_p, adj_p, x_p)
        refs_p = (np.asarray(refs_p[0][:N, :n_classes]),
                  np.asarray(refs_p[1][:N, :n_classes]),
                  np.asarray(refs_p[2][:N, :in_feats]),
                  np.asarray(refs_p[3][:N, :N]))
        for got, want in zip((A_z, S_z, A_recon, S_recon), refs_p):
            np.testing.assert_allclose(got, want, rtol=2e-3, atol=2e-3)

        # 2) Loose check vs. original full-f32 module semantics (small graphs only;
        #    bf16 SpMM deviation grows ~sqrt(N)).
        if check_f32:
            refs_f32 = _ref_forward_f32(params, adj_norm, features)
            for got, want in zip((A_z, S_z, A_recon, S_recon), refs_f32):
                np.testing.assert_allclose(got, np.asarray(want), rtol=5e-2, atol=5e-2)

    # Case 1: module demo config (small) -> fully-fused single-kernel path.
    run_case(seed=0, N=8, in_feats=16, n_hidden=32, n_classes=8, n_layers=1,
             force_tiled=False, check_f32=True)

    # Case 2: larger graph -> tiled multi-kernel path (multi-step reduction,
    # hw-resident SpMM, bf16 S_z handoff, lane-dense inner-product tiles).
    run_case(seed=1, N=1500, in_feats=16, n_hidden=32, n_classes=8, n_layers=2,
             force_tiled=True, check_f32=False)

    print("KERNEL_OK")
</pallas_src>

<mosaic_0001>
module attributes {stable_mosaic.version = 11 : i64} {
  func.func @_fused_kernel(%arg0: memref<128x128xbf16, #tpu.memory_space<vmem>>, %arg1: memref<128x128xbf16, #tpu.memory_space<vmem>>, %arg2: memref<128x128xbf16, #tpu.memory_space<vmem>>, %arg3: memref<1x128xf32, #tpu.memory_space<vmem>>, %arg4: memref<128x128xbf16, #tpu.memory_space<vmem>>, %arg5: memref<1x128xf32, #tpu.memory_space<vmem>>, %arg6: memref<128x128xbf16, #tpu.memory_space<vmem>>, %arg7: memref<1x128xf32, #tpu.memory_space<vmem>>, %arg8: memref<128x128xbf16, #tpu.memory_space<vmem>>, %arg9: memref<1x128xf32, #tpu.memory_space<vmem>>, %arg10: memref<128x128xbf16, #tpu.memory_space<vmem>>, %arg11: memref<1x128xf32, #tpu.memory_space<vmem>>, %arg12: memref<128x128xbf16, #tpu.memory_space<vmem>>, %arg13: memref<1x128xf32, #tpu.memory_space<vmem>>, %arg14: memref<128x128xf32, #tpu.memory_space<vmem>>, %arg15: memref<128x128xf32, #tpu.memory_space<vmem>>, %arg16: memref<128x128xf32, #tpu.memory_space<vmem>>, %arg17: memref<128x128xf32, #tpu.memory_space<vmem>>) attributes {dimension_semantics = [], scalar_prefetch = 0 : i64, scratch_operands = 0 : i64, tpu.core_type = #tpu.core_type<tc>} {
    %c0 = arith.constant 0 : index
    %c0_0 = arith.constant 0 : index
    %0 = vector.load %arg0[%c0, %c0_0] : memref<128x128xbf16, #tpu.memory_space<vmem>>, vector<128x128xbf16>
    %c0_1 = arith.constant 0 : index
    %c0_2 = arith.constant 0 : index
    %1 = vector.load %arg1[%c0_1, %c0_2] : memref<128x128xbf16, #tpu.memory_space<vmem>>, vector<128x128xbf16>
    %c0_3 = arith.constant 0 : index
    %c0_4 = arith.constant 0 : index
    %2 = vector.load %arg2[%c0_3, %c0_4] : memref<128x128xbf16, #tpu.memory_space<vmem>>, vector<128x128xbf16>
    %c0_5 = arith.constant 0 : index
    %c0_6 = arith.constant 0 : index
    %3 = vector.load %arg3[%c0_5, %c0_6] : memref<1x128xf32, #tpu.memory_space<vmem>>, vector<1x128xf32>
    %cst = arith.constant dense<0.000000e+00> : vector<128x128xf32>
    %4 = tpu.matmul %0, %2, %cst {dimension_numbers = #tpu.dot_dimension_numbers<[1], [0], [0], [1], [0, 0, 1, 1], [], []>} : vector<128x128xbf16>, vector<128x128xbf16>, vector<128x128xf32> -> vector<128x128xf32>
    %5 = vector.broadcast %3 : vector<1x128xf32> to vector<128x128xf32>
    %6 = arith.addf %4, %5 : vector<128x128xf32>
    %cst_7 = arith.constant 0.000000e+00 : f32
    %7 = vector.broadcast %cst_7 : f32 to vector<128x128xf32>
    %8 = arith.maximumf %6, %7 : vector<128x128xf32>
    %9 = arith.truncf %8 : vector<128x128xf32> to vector<128x128xbf16>
    %c0_8 = arith.constant 0 : index
    %c0_9 = arith.constant 0 : index
    %10 = vector.load %arg4[%c0_8, %c0_9] : memref<128x128xbf16, #tpu.memory_space<vmem>>, vector<128x128xbf16>
    %c0_10 = arith.constant 0 : index
    %c0_11 = arith.constant 0 : index
    %11 = vector.load %arg5[%c0_10, %c0_11] : memref<1x128xf32, #tpu.memory_space<vmem>>, vector<1x128xf32>
    %cst_12 = arith.constant dense<0.000000e+00> : vector<128x128xf32>
    %12 = tpu.matmul %9, %10, %cst_12 {dimension_numbers = #tpu.dot_dimension_numbers<[1], [0], [0], [1], [0, 0, 1, 1], [], []>} : vector<128x128xbf16>, vector<128x128xbf16>, vector<128x128xf32> -> vector<128x128xf32>
    %13 = vector.broadcast %11 : vector<1x128xf32> to vector<128x128xf32>
    %14 = arith.addf %12, %13 : vector<128x128xf32>
    %c0_13 = arith.constant 0 : index
    %c0_14 = arith.constant 0 : index
    %15 = vector.load %arg14[%c0_13, %c0_14] : memref<128x128xf32, #tpu.memory_space<vmem>>, vector<128x128xf32>
    tpu.vector_store %arg14[%c0_13, %c0_14], %14 {strides = array<i32>} : memref<128x128xf32, #tpu.memory_space<vmem>>, vector<128x128xf32>,
    %c0_15 = arith.constant 0 : index
    %c0_16 = arith.constant 0 : index
    %16 = vector.load %arg6[%c0_15, %c0_16] : memref<128x128xbf16, #tpu.memory_space<vmem>>, vector<128x128xbf16>
    %c0_17 = arith.constant 0 : index
    %c0_18 = arith.constant 0 : index
    %17 = vector.load %arg7[%c0_17, %c0_18] : memref<1x128xf32, #tpu.memory_space<vmem>>, vector<1x128xf32>
    %cst_19 = arith.constant dense<0.000000e+00> : vector<128x128xf32>
    %18 = tpu.matmul %0, %16, %cst_19 {dimension_numbers = #tpu.dot_dimension_numbers<[1], [0], [0], [1], [0, 0, 1, 1], [], []>} : vector<128x128xbf16>, vector<128x128xbf16>, vector<128x128xf32> -> vector<128x128xf32>
    %19 = arith.truncf %18 : vector<128x128xf32> to vector<128x128xbf16>
    %cst_20 = arith.constant dense<0.000000e+00> : vector<128x128xf32>
    %20 = tpu.matmul %1, %19, %cst_20 {dimension_numbers = #tpu.dot_dimension_numbers<[1], [0], [0], [1], [0, 0, 1, 1], [], []>} : vector<128x128xbf16>, vector<128x128xbf16>, vector<128x128xf32> -> vector<128x128xf32>
    %21 = vector.broadcast %17 : vector<1x128xf32> to vector<128x128xf32>
    %22 = arith.addf %20, %21 : vector<128x128xf32>
    %cst_21 = arith.constant 0.000000e+00 : f32
    %23 = vector.broadcast %cst_21 : f32 to vector<128x128xf32>
    %24 = arith.maximumf %22, %23 : vector<128x128xf32>
    %25 = arith.truncf %24 : vector<128x128xf32> to vector<128x128xbf16>
    %c0_22 = arith.constant 0 : index
    %c0_23 = arith.constant 0 : index
    %26 = vector.load %arg8[%c0_22, %c0_23] : memref<128x128xbf16, #tpu.memory_space<vmem>>, vector<128x128xbf16>
    %c0_24 = arith.constant 0 : index
    %c0_25 = arith.constant 0 : index
    %27 = vector.load %arg9[%c0_24, %c0_25] : memref<1x128xf32, #tpu.memory_space<vmem>>, vector<1x128xf32>
    %cst_26 = arith.constant dense<0.000000e+00> : vector<128x128xf32>
    %28 = tpu.matmul %25, %26, %cst_26 {dimension_numbers = #tpu.dot_dimension_numbers<[1], [0], [0], [1], [0, 0, 1, 1], [], []>} : vector<128x128xbf16>, vector<128x128xbf16>, vector<128x128xf32> -> vector<128x128xf32>
    %29 = arith.truncf %28 : vector<128x128xf32> to vector<128x128xbf16>
    %cst_27 = arith.constant dense<0.000000e+00> : vector<128x128xf32>
    %30 = tpu.matmul %1, %29, %cst_27 {dimension_numbers = #tpu.dot_dimension_numbers<[1], [0], [0], [1], [0, 0, 1, 1], [], []>} : vector<128x128xbf16>, vector<128x128xbf16>, vector<128x128xf32> -> vector<128x128xf32>
    %31 = vector.broadcast %27 : vector<1x128xf32> to vector<128x128xf32>
    %32 = arith.addf %30, %31 : vector<128x128xf32>
    %c0_28 = arith.constant 0 : index
    %c0_29 = arith.constant 0 : index
    %33 = vector.load %arg15[%c0_28, %c0_29] : memref<128x128xf32, #tpu.memory_space<vmem>>, vector<128x128xf32>
    tpu.vector_store %arg15[%c0_28, %c0_29], %32 {strides = array<i32>} : memref<128x128xf32, #tpu.memory_space<vmem>>, vector<128x128xf32>,
    %34 = arith.addf %14, %32 : vector<128x128xf32>
    %35 = arith.truncf %34 : vector<128x128xf32> to vector<128x128xbf16>
    %c0_30 = arith.constant 0 : index
    %c0_31 = arith.constant 0 : index
    %36 = vector.load %arg10[%c0_30, %c0_31] : memref<128x128xbf16, #tpu.memory_space<vmem>>, vector<128x128xbf16>
    %c0_32 = arith.constant 0 : index
    %c0_33 = arith.constant 0 : index
    %37 = vector.load %arg11[%c0_32, %c0_33] : memref<1x128xf32, #tpu.memory_space<vmem>>, vector<1x128xf32>
    %cst_34 = arith.constant dense<0.000000e+00> : vector<128x128xf32>
    %38 = tpu.matmul %35, %36, %cst_34 {dimension_numbers = #tpu.dot_dimension_numbers<[1], [0], [0], [1], [0, 0, 1, 1], [], []>} : vector<128x128xbf16>, vector<128x128xbf16>, vector<128x128xf32> -> vector<128x128xf32>
    %39 = vector.broadcast %37 : vector<1x128xf32> to vector<128x128xf32>
    %40 = arith.addf %38, %39 : vector<128x128xf32>
    %cst_35 = arith.constant 0.000000e+00 : f32
    %41 = vector.broadcast %cst_35 : f32 to vector<128x128xf32>
    %42 = arith.maximumf %40, %41 : vector<128x128xf32>
    %43 = arith.truncf %42 : vector<128x128xf32> to vector<128x128xbf16>
    %c0_36 = arith.constant 0 : index
    %c0_37 = arith.constant 0 : index
    %44 = vector.load %arg12[%c0_36, %c0_37] : memref<128x128xbf16, #tpu.memory_space<vmem>>, vector<128x128xbf16>
    %c0_38 = arith.constant 0 : index
    %c0_39 = arith.constant 0 : index
    %45 = vector.load %arg13[%c0_38, %c0_39] : memref<1x128xf32, #tpu.memory_space<vmem>>, vector<1x128xf32>
    %cst_40 = arith.constant dense<0.000000e+00> : vector<128x128xf32>
    %46 = tpu.matmul %43, %44, %cst_40 {dimension_numbers = #tpu.dot_dimension_numbers<[1], [0], [0], [1], [0, 0, 1, 1], [], []>} : vector<128x128xbf16>, vector<128x128xbf16>, vector<128x128xf32> -> vector<128x128xf32>
    %47 = vector.broadcast %45 : vector<1x128xf32> to vector<128x128xf32>
    %48 = arith.addf %46, %47 : vector<128x128xf32>
    %c0_41 = arith.constant 0 : index
    %c0_42 = arith.constant 0 : index
    %49 = vector.load %arg16[%c0_41, %c0_42] : memref<128x128xf32, #tpu.memory_space<vmem>>, vector<128x128xf32>
    tpu.vector_store %arg16[%c0_41, %c0_42], %48 {strides = array<i32>} : memref<128x128xf32, #tpu.memory_space<vmem>>, vector<128x128xf32>,
    %50 = arith.truncf %32 : vector<128x128xf32> to vector<128x128xbf16>
    %cst_43 = arith.constant dense<0.000000e+00> : vector<128x128xf32>
    %51 = tpu.matmul %50, %50, %cst_43 {dimension_numbers = #tpu.dot_dimension_numbers<[1], [1], [0], [0], [0, 0, 1, 0], [], []>} : vector<128x128xbf16>, vector<128x128xbf16>, vector<128x128xf32> -> vector<128x128xf32>
    %52 = arith.negf %51 : vector<128x128xf32>
    %53 = math.exp %52 : vector<128x128xf32>
    %cst_44 = arith.constant 1.000000e+00 : f32
    %54 = vector.broadcast %cst_44 : f32 to vector<128x128xf32>
    %55 = arith.addf %54, %53 : vector<128x128xf32>
    %56 = arith.divf %54, %55 : vector<128x128xf32>
    %c0_45 = arith.constant 0 : index
    %c0_46 = arith.constant 0 : index
    %57 = vector.load %arg17[%c0_45, %c0_46] : memref<128x128xf32, #tpu.memory_space<vmem>>, vector<128x128xf32>
    tpu.vector_store %arg17[%c0_45, %c0_46], %56 {strides = array<i32>} : memref<128x128xf32, #tpu.memory_space<vmem>>, vector<128x128xf32>,
    return
  }
}

</mosaic_0001>

<llo_original>
// kernel: svdae_forward_pallas.1
$region0: #{svdae_forward_pallas.1}
  #allocation0 [shape = 'u32[]', space=smem, size = 0x4, offset = 0x4, fixed_abs, tag = 'smem constant byte address 0x4 - core index']
  #allocation1 [shape = 'u32[144,128]{1,0:T(1,128)}', space=vmem, size = 0x12000, scoped, tag = 'internal scratch']
  %s0 = inlined_call_operand.hbm [shape: bf16[128,128], index: 0, kind: input, shape index: {}]
  %s1 = inlined_call_operand.hbm [shape: bf16[128,128], index: 1, kind: input, shape index: {}]
  %s2 = inlined_call_operand.hbm [shape: bf16[128,128], index: 2, kind: input, shape index: {}]
  %s3 = inlined_call_operand.vmem [shape: f32[1,128], index: 3, kind: input, shape index: {}]
  %s4 = inlined_call_operand.hbm [shape: bf16[128,128], index: 4, kind: input, shape index: {}]
  %s5 = inlined_call_operand.vmem [shape: f32[1,128], index: 5, kind: input, shape index: {}]
  %s6 = inlined_call_operand.hbm [shape: bf16[128,128], index: 6, kind: input, shape index: {}]
  %s7 = inlined_call_operand.vmem [shape: f32[1,128], index: 7, kind: input, shape index: {}]
  %s8 = inlined_call_operand.hbm [shape: bf16[128,128], index: 8, kind: input, shape index: {}]
  %s9 = inlined_call_operand.vmem [shape: f32[1,128], index: 9, kind: input, shape index: {}]
  %s10 = inlined_call_operand.hbm [shape: bf16[128,128], index: 10, kind: input, shape index: {}]
  %s11 = inlined_call_operand.hbm [shape: f32[1,128], index: 11, kind: input, shape index: {}]
  %s12 = inlined_call_operand.hbm [shape: bf16[128,128], index: 12, kind: input, shape index: {}]
  %s13 = inlined_call_operand.vmem [shape: f32[1,128], index: 13, kind: input, shape index: {}]
  %s14 = inlined_call_operand.hbm [shape: f32[128,128], index: 14, kind: output, shape index: {0}]
  %s15 = inlined_call_operand.hbm [shape: f32[128,128], index: 15, kind: output, shape index: {1}]
  %s16 = inlined_call_operand.hbm [shape: f32[128,128], index: 16, kind: output, shape index: {2}]
  %s17 = inlined_call_operand.hbm [shape: f32[128,128], index: 17, kind: output, shape index: {3}]
  %18 = xla_tuple %s14, %s15, %s16, %s17
  %s19 = sld [smem:[#allocation0]]
  $region126: #{svdae_forward_pallas.1} parent=0
    _
  %s21 = ssub.s32 1, %s19
  %s22 = scalar_select 0, %s21, %s19
  $region1: #{svdae_forward_pallas.1} parent=0
    #allocation2 [shape = 'u8[32768]{0}', space=vmem, size = 0x8000, scoped, tag = 'input window, operand 0, single buffered']
    #allocation3 [shape = 's32[1]{0}', space=sflag, size = 0x4, scoped, tag = 'scoped memory for svdae_forward_pallas.1']
    #allocation4 [shape = 's32[1]{0}', space=sflag, size = 0x4, scoped, tag = 'scoped memory for svdae_forward_pallas.1']
    #allocation5 [shape = 'u8[32768]{0}', space=vmem, size = 0x8000, scoped, tag = 'input window, operand 1, single buffered']
    #allocation6 [shape = 's32[1]{0}', space=sflag, size = 0x4, scoped, tag = 'scoped memory for svdae_forward_pallas.1']
    #allocation7 [shape = 'u8[32768]{0}', space=vmem, size = 0x8000, scoped, tag = 'input window, operand 2, single buffered']
    #allocation8 [shape = 'u8[32768]{0}', space=vmem, size = 0x8000, scoped, tag = 'input window, operand 4, single buffered']
    #allocation9 [shape = 's32[1]{0}', space=sflag, size = 0x4, scoped, tag = 'scoped memory for svdae_forward_pallas.1']
    #allocation10 [shape = 'u8[32768]{0}', space=vmem, size = 0x8000, scoped, tag = 'input window, operand 6, single buffered']
    #allocation11 [shape = 'u8[32768]{0}', space=vmem, size = 0x8000, scoped, tag = 'input window, operand 8, single buffered']
    #allocation12 [shape = 's32[1]{0}', space=sflag, size = 0x4, scoped, tag = 'scoped memory for svdae_forward_pallas.1']
    #allocation13 [shape = 'u8[32768]{0}', space=vmem, size = 0x8000, scoped, tag = 'input window, operand 10, single buffered']
    #allocation14 [shape = 'u8[512]{0}', space=vmem, size = 0x400, scoped, tag = 'input window, operand 11, single buffered']
    #allocation15 [shape = 's32[1]{0}', space=sflag, size = 0x4, scoped, tag = 'scoped memory for svdae_forward_pallas.1']
    #allocation16 [shape = 'u8[32768]{0}', space=vmem, size = 0x8000, scoped, tag = 'input window, operand 12, single buffered']
    #allocation17 [shape = 'u8[65536]{0}', space=vmem, size = 0x10000, scoped, tag = 'output window, operand 0, single buffered']
    #allocation18 [shape = 'u8[65536]{0}', space=vmem, size = 0x10000, scoped, tag = 'output window, operand 1, single buffered']
    #allocation19 [shape = 's32[1]{0}', space=sflag, size = 0x4, scoped, tag = 'scoped memory for svdae_forward_pallas.1']
    #allocation20 [shape = 'u8[65536]{0}', space=vmem, size = 0x10000, scoped, tag = 'output window, operand 2, single buffered']
    #allocation21 [shape = 'u8[65536]{0}', space=vmem, size = 0x10000, scoped, tag = 'output window, operand 3, single buffered']
    #allocation22 [shape = 's32[1]{0}', space=sflag, size = 0x4, scoped, tag = 'scoped memory for svdae_forward_pallas.1']
    %23 = vsyncpa [#allocation3], 0
    %24 = vsyncpa [#allocation6], 0
    %25 = vsyncpa [#allocation9], 0
    %26 = vsyncpa [#allocation12], 0
    %27 = vsyncpa [#allocation15], 0
    %28 = vsyncpa [#allocation4], 0
    %29 = vsyncpa [#allocation19], 0
    %30 = vsyncpa [#allocation22], 0
    // Predicated region
    $region2: #{svdae_forward_pallas.1} parent=1 // pred_check
      _
    $region3: #{svdae_forward_pallas.1} parent=1 // pred_check_branch
      %32 = sbr.rel (0) target = $region5
    $region4: #{svdae_forward_pallas.1} parent=1 // pred_region
      %s34 = ssub.s32 1024, 1024
      %35 = vsyncadd [#allocation3], %s34
      %s36 = sshll.u32 [#allocation2], 4
      %s37 = int_to_ptr.vmem [resolvable:$true] %s36
      %42 = dma.hbm_to_vmem [thread:$0]  %s0, 1024, %s37, [#allocation3], 64, 64, 4
    $region5: #{svdae_forward_pallas.1} parent=1 // pred_fallthru
      _
    // Predicated region
    $region6: #{svdae_forward_pallas.1} parent=1 // pred_check
      _
    $region7: #{svdae_forward_pallas.1} parent=1 // pred_check_branch
      %44 = sbr.rel (0) target = $region9
    $region8: #{svdae_forward_pallas.1} parent=1 // pred_region
      %s46 = ssub.s32 1024, 1024
      %47 = vsyncadd [#allocation6], %s46
      %s48 = sshll.u32 [#allocation5], 4
      %s49 = int_to_ptr.vmem [resolvable:$true] %s48
      %54 = dma.hbm_to_vmem [thread:$0]  %s1, 1024, %s49, [#allocation6], 64, 64, 4
    $region9: #{svdae_forward_pallas.1} parent=1 // pred_fallthru
      _
    // Predicated region
    $region10: #{svdae_forward_pallas.1} parent=1 // pred_check
      _
    $region11: #{svdae_forward_pallas.1} parent=1 // pred_check_branch
      %56 = sbr.rel (0) target = $region13
    $region12: #{svdae_forward_pallas.1} parent=1 // pred_region
      %s58 = ssub.s32 1024, 1024
      %59 = vsyncadd [#allocation6], %s58
      %s60 = sshll.u32 [#allocation7], 4
      %s61 = int_to_ptr.vmem [resolvable:$true] %s60
      %66 = dma.hbm_to_vmem [thread:$0]  %s2, 1024, %s61, [#allocation6], 64, 64, 4
    $region13: #{svdae_forward_pallas.1} parent=1 // pred_fallthru
      _
    // Predicated region
    $region14: #{svdae_forward_pallas.1} parent=1 // pred_check
      _
    $region15: #{svdae_forward_pallas.1} parent=1 // pred_check_branch
      %68 = sbr.rel (0) target = $region17
    $region16: #{svdae_forward_pallas.1} parent=1 // pred_region
      _
    $region17: #{svdae_forward_pallas.1} parent=1 // pred_fallthru
      _
    // Predicated region
    $region18: #{svdae_forward_pallas.1} parent=1 // pred_check
      _
    $region19: #{svdae_forward_pallas.1} parent=1 // pred_check_branch
      %70 = sbr.rel (0) target = $region21
    $region20: #{svdae_forward_pallas.1} parent=1 // pred_region
      %s72 = ssub.s32 1024, 1024
      %73 = vsyncadd [#allocation9], %s72
      %s74 = sshll.u32 [#allocation8], 4
      %s75 = int_to_ptr.vmem [resolvable:$true] %s74
      %80 = dma.hbm_to_vmem [thread:$0]  %s4, 1024, %s75, [#allocation9], 64, 64, 4
    $region21: #{svdae_forward_pallas.1} parent=1 // pred_fallthru
      _
    // Predicated region
    $region22: #{svdae_forward_pallas.1} parent=1 // pred_check
      _
    $region23: #{svdae_forward_pallas.1} parent=1 // pred_check_branch
      %82 = sbr.rel (0) target = $region25
    $region24: #{svdae_forward_pallas.1} parent=1 // pred_region
      _
    $region25: #{svdae_forward_pallas.1} parent=1 // pred_fallthru
      _
    // Predicated region
    $region26: #{svdae_forward_pallas.1} parent=1 // pred_check
      _
    $region27: #{svdae_forward_pallas.1} parent=1 // pred_check_branch
      %84 = sbr.rel (0) target = $region29
    $region28: #{svdae_forward_pallas.1} parent=1 // pred_region
      %s86 = ssub.s32 1024, 1024
      %87 = vsyncadd [#allocation9], %s86
      %s88 = sshll.u32 [#allocation10], 4
      %s89 = int_to_ptr.vmem [resolvable:$true] %s88
      %94 = dma.hbm_to_vmem [thread:$0]  %s6, 1024, %s89, [#allocation9], 64, 64, 4
    $region29: #{svdae_forward_pallas.1} parent=1 // pred_fallthru
      _
    // Predicated region
    $region30: #{svdae_forward_pallas.1} parent=1 // pred_check
      _
    $region31: #{svdae_forward_pallas.1} parent=1 // pred_check_branch
      %96 = sbr.rel (0) target = $region33
    $region32: #{svdae_forward_pallas.1} parent=1 // pred_region
      _
    $region33: #{svdae_forward_pallas.1} parent=1 // pred_fallthru
      _
    // Predicated region
    $region34: #{svdae_forward_pallas.1} parent=1 // pred_check
      _
    $region35: #{svdae_forward_pallas.1} parent=1 // pred_check_branch
      %98 = sbr.rel (0) target = $region37
    $region36: #{svdae_forward_pallas.1} parent=1 // pred_region
      %s100 = ssub.s32 1024, 1024
      %101 = vsyncadd [#allocation12], %s100
      %s102 = sshll.u32 [#allocation11], 4
      %s103 = int_to_ptr.vmem [resolvable:$true] %s102
      %108 = dma.hbm_to_vmem [thread:$0]  %s8, 1024, %s103, [#allocation12], 64, 64, 4
    $region37: #{svdae_forward_pallas.1} parent=1 // pred_fallthru
      _
    // Predicated region
    $region38: #{svdae_forward_pallas.1} parent=1 // pred_check
      _
    $region39: #{svdae_forward_pallas.1} parent=1 // pred_check_branch
      %110 = sbr.rel (0) target = $region41
    $region40: #{svdae_forward_pallas.1} parent=1 // pred_region
      _
    $region41: #{svdae_forward_pallas.1} parent=1 // pred_fallthru
      _
    // Predicated region
    $region42: #{svdae_forward_pallas.1} parent=1 // pred_check
      _
    $region43: #{svdae_forward_pallas.1} parent=1 // pred_check_branch
      %112 = sbr.rel (0) target = $region45
    $region44: #{svdae_forward_pallas.1} parent=1 // pred_region
      %s114 = ssub.s32 1024, 1024
      %115 = vsyncadd [#allocation12], %s114
      %s116 = sshll.u32 [#allocation13], 4
      %s117 = int_to_ptr.vmem [resolvable:$true] %s116
      %122 = dma.hbm_to_vmem [thread:$0]  %s10, 1024, %s117, [#allocation12], 64, 64, 4
    $region45: #{svdae_forward_pallas.1} parent=1 // pred_fallthru
      _
    // Predicated region
    $region46: #{svdae_forward_pallas.1} parent=1 // pred_check
      _
    $region47: #{svdae_forward_pallas.1} parent=1 // pred_check_branch
      %124 = sbr.rel (0) target = $region49
    $region48: #{svdae_forward_pallas.1} parent=1 // pred_region
      %s126 = ssub.s32 16, 16
      %127 = vsyncadd [#allocation15], %s126
      %s129 = sshll.u32 [#allocation14], 4
      %s130 = int_to_ptr.vmem [resolvable:$true] %s129
      %132 = dma.hbm_to_vmem [thread:$0]  %s11, 16, %s130, [#allocation15]
    $region49: #{svdae_forward_pallas.1} parent=1 // pred_fallthru
      _
    // Predicated region
    $region50: #{svdae_forward_pallas.1} parent=1 // pred_check
      _
    $region51: #{svdae_forward_pallas.1} parent=1 // pred_check_branch
      %134 = sbr.rel (0) target = $region53
    $region52: #{svdae_forward_pallas.1} parent=1 // pred_region
      %s136 = ssub.s32 1024, 1024
      %137 = vsyncadd [#allocation15], %s136
      %s138 = sshll.u32 [#allocation16], 4
      %s139 = int_to_ptr.vmem [resolvable:$true] %s138
      %144 = dma.hbm_to_vmem [thread:$0]  %s12, 1024, %s139, [#allocation15], 64, 64, 4
    $region53: #{svdae_forward_pallas.1} parent=1 // pred_fallthru
      _
    // Predicated region
    $region54: #{svdae_forward_pallas.1} parent=1 // pred_check
      _
    $region55: #{svdae_forward_pallas.1} parent=1 // pred_check_branch
      %146 = sbr.rel (0) target = $region57
    $region56: #{svdae_forward_pallas.1} parent=1 // pred_region
      _
    $region57: #{svdae_forward_pallas.1} parent=1 // pred_fallthru
      _
    // Predicated region
    $region58: #{svdae_forward_pallas.1} parent=1 // pred_check
      _
    $region59: #{svdae_forward_pallas.1} parent=1 // pred_check_branch
      %148 = sbr.rel (0) target = $region61
    $region60: #{svdae_forward_pallas.1} parent=1 // pred_region
      %149 = dma.done [#allocation3], 1024
    $region61: #{svdae_forward_pallas.1} parent=1 // pred_fallthru
      _
    // Predicated region
    $region62: #{svdae_forward_pallas.1} parent=1 // pred_check
      _
    $region63: #{svdae_forward_pallas.1} parent=1 // pred_check_branch
      %151 = sbr.rel (0) target = $region65
    $region64: #{svdae_forward_pallas.1} parent=1 // pred_region
      %152 = dma.done [#allocation6], 1024
    $region65: #{svdae_forward_pallas.1} parent=1 // pred_fallthru
      _
    // Predicated region
    $region66: #{svdae_forward_pallas.1} parent=1 // pred_check
      _
    $region67: #{svdae_forward_pallas.1} parent=1 // pred_check_branch
      %154 = sbr.rel (0) target = $region69
    $region68: #{svdae_forward_pallas.1} parent=1 // pred_region
      %155 = dma.done [#allocation6], 1024
    $region69: #{svdae_forward_pallas.1} parent=1 // pred_fallthru
      _
    // Predicated region
    $region70: #{svdae_forward_pallas.1} parent=1 // pred_check
      _
    $region71: #{svdae_forward_pallas.1} parent=1 // pred_check_branch
      %157 = sbr.rel (0) target = $region73
    $region72: #{svdae_forward_pallas.1} parent=1 // pred_region
      %158 = dma.done [#allocation9], 1024
    $region73: #{svdae_forward_pallas.1} parent=1 // pred_fallthru
      _
    // Predicated region
    $region74: #{svdae_forward_pallas.1} parent=1 // pred_check
      _
    $region75: #{svdae_forward_pallas.1} parent=1 // pred_check_branch
      %160 = sbr.rel (0) target = $region77
    $region76: #{svdae_forward_pallas.1} parent=1 // pred_region
      %161 = dma.done [#allocation9], 1024
    $region77: #{svdae_forward_pallas.1} parent=1 // pred_fallthru
      _
    // Predicated region
    $region78: #{svdae_forward_pallas.1} parent=1 // pred_check
      _
    $region79: #{svdae_forward_pallas.1} parent=1 // pred_check_branch
      %163 = sbr.rel (0) target = $region81
    $region80: #{svdae_forward_pallas.1} parent=1 // pred_region
      %164 = dma.done [#allocation12], 1024
    $region81: #{svdae_forward_pallas.1} parent=1 // pred_fallthru
      _
    // Predicated region
    $region82: #{svdae_forward_pallas.1} parent=1 // pred_check
      _
    $region83: #{svdae_forward_pallas.1} parent=1 // pred_check_branch
      %166 = sbr.rel (0) target = $region85
    $region84: #{svdae_forward_pallas.1} parent=1 // pred_region
      %167 = dma.done [#allocation12], 1024
    $region85: #{svdae_forward_pallas.1} parent=1 // pred_fallthru
      _
    // Predicated region
    $region86: #{svdae_forward_pallas.1} parent=1 // pred_check
      _
    $region87: #{svdae_forward_pallas.1} parent=1 // pred_check_branch
      %169 = sbr.rel (0) target = $region89
    $region88: #{svdae_forward_pallas.1} parent=1 // pred_region
      %170 = dma.done [#allocation15], 16
    $region89: #{svdae_forward_pallas.1} parent=1 // pred_fallthru
      _
    // Predicated region
    $region90: #{svdae_forward_pallas.1} parent=1 // pred_check
      _
    $region91: #{svdae_forward_pallas.1} parent=1 // pred_check_branch
      %172 = sbr.rel (0) target = $region93
    $region92: #{svdae_forward_pallas.1} parent=1 // pred_region
      %173 = dma.done [#allocation15], 1024
    $region93: #{svdae_forward_pallas.1} parent=1 // pred_fallthru
      _
    %v175 = vld [vmem:[#allocation2] sm:$0xf]
    %v176 = vld [vmem:[#allocation2 + $0x4] sm:$0xf]
    %v177 = vld [vmem:[#allocation2 + $0x8] sm:$0xf]
    %v178 = vld [vmem:[#allocation2 + $0xc] sm:$0xf]
    %v179 = vld [vmem:[#allocation2 + $0x10] sm:$0xf]
    %v180 = vld [vmem:[#allocation2 + $0x14] sm:$0xf]
    %v181 = vld [vmem:[#allocation2 + $0x18] sm:$0xf]
    %v182 = vld [vmem:[#allocation2 + $0x1c] sm:$0xf]
    %v183 = vld [vmem:[#allocation2 + $0x20] sm:$0xf]
    %v184 = vld [vmem:[#allocation2 + $0x24] sm:$0xf]
    %v185 = vld [vmem:[#allocation2 + $0x28] sm:$0xf]
    %v186 = vld [vmem:[#allocation2 + $0x2c] sm:$0xf]
    %v187 = vld [vmem:[#allocation2 + $0x30] sm:$0xf]
    %v188 = vld [vmem:[#allocation2 + $0x34] sm:$0xf]
    %v189 = vld [vmem:[#allocation2 + $0x38] sm:$0xf]
    %v190 = vld [vmem:[#allocation2 + $0x3c] sm:$0xf]
    %v191 = vld [vmem:[#allocation5] sm:$0xf]
    %v192 = vld [vmem:[#allocation5 + $0x4] sm:$0xf]
    %v193 = vld [vmem:[#allocation5 + $0x8] sm:$0xf]
    %v194 = vld [vmem:[#allocation5 + $0xc] sm:$0xf]
    %v195 = vld [vmem:[#allocation5 + $0x10] sm:$0xf]
    %v196 = vld [vmem:[#allocation5 + $0x14] sm:$0xf]
    %v197 = vld [vmem:[#allocation5 + $0x18] sm:$0xf]
    %v198 = vld [vmem:[#allocation5 + $0x1c] sm:$0xf]
    %v199 = vld [vmem:[#allocation5 + $0x20] sm:$0xf]
    %v200 = vld [vmem:[#allocation5 + $0x24] sm:$0xf]
    %v201 = vld [vmem:[#allocation5 + $0x28] sm:$0xf]
    %v202 = vld [vmem:[#allocation5 + $0x2c] sm:$0xf]
    %v203 = vld [vmem:[#allocation5 + $0x30] sm:$0xf]
    %v204 = vld [vmem:[#allocation5 + $0x34] sm:$0xf]
    %v205 = vld [vmem:[#allocation5 + $0x38] sm:$0xf]
    %v206 = vld [vmem:[#allocation5 + $0x3c] sm:$0xf]
    %v207 = vld [vmem:[#allocation7] sm:$0xf]
    %v208 = vld [vmem:[#allocation7 + $0x4] sm:$0xf]
    %v209 = vld [vmem:[#allocation7 + $0x8] sm:$0xf]
    %v210 = vld [vmem:[#allocation7 + $0xc] sm:$0xf]
    %v211 = vld [vmem:[#allocation7 + $0x10] sm:$0xf]
    %v212 = vld [vmem:[#allocation7 + $0x14] sm:$0xf]
    %v213 = vld [vmem:[#allocation7 + $0x18] sm:$0xf]
    %v214 = vld [vmem:[#allocation7 + $0x1c] sm:$0xf]
    %v215 = vld [vmem:[#allocation7 + $0x20] sm:$0xf]
    %v216 = vld [vmem:[#allocation7 + $0x24] sm:$0xf]
    %v217 = vld [vmem:[#allocation7 + $0x28] sm:$0xf]
    %v218 = vld [vmem:[#allocation7 + $0x2c] sm:$0xf]
    %v219 = vld [vmem:[#allocation7 + $0x30] sm:$0xf]
    %v220 = vld [vmem:[#allocation7 + $0x34] sm:$0xf]
    %v221 = vld [vmem:[#allocation7 + $0x38] sm:$0xf]
    %v222 = vld [vmem:[#allocation7 + $0x3c] sm:$0xf]
    %v223 = vld [vmem:[%s3] sm:$0x1]
    %v225 = vlaneseq
    %v226 = vshrl.u32 %v225, 7
    %v227 = vsub.s32 0, %v226
    %v228 = vrot.slane %v223, %v227
    %v246 = vunpack.c.l.b16 %v175
    %v247 = vunpack.c.l.b16 %v176
    %v248 = vunpack.c.l.b16 %v177
    %v249 = vunpack.c.l.b16 %v178
    %v250 = vunpack.c.l.b16 %v179
    %v251 = vunpack.c.l.b16 %v180
    %v252 = vunpack.c.l.b16 %v181
    %v253 = vunpack.c.l.b16 %v182
    %v254 = vunpack.c.l.b16 %v183
    %v255 = vunpack.c.l.b16 %v184
    %v256 = vunpack.c.l.b16 %v185
    %v257 = vunpack.c.l.b16 %v186
    %v258 = vunpack.c.l.b16 %v187
    %v259 = vunpack.c.l.b16 %v188
    %v260 = vunpack.c.l.b16 %v189
    %v261 = vunpack.c.l.b16 %v190
    %v262 = vpack.c.b16 %v247, %v246
    %v263 = vpack.c.b16 %v249, %v248
    %v264 = vpack.c.b16 %v251, %v250
    %v265 = vpack.c.b16 %v253, %v252
    %v266 = vpack.c.b16 %v255, %v254
    %v267 = vpack.c.b16 %v257, %v256
    %v268 = vpack.c.b16 %v259, %v258
    %v269 = vpack.c.b16 %v261, %v260
    %v294 = vunpack.c.l.b16 %v207
    %v295 = vunpack.c.l.b16 %v208
    %v296 = vunpack.c.l.b16 %v209
    %v297 = vunpack.c.l.b16 %v210
    %v298 = vunpack.c.l.b16 %v211
    %v299 = vunpack.c.l.b16 %v212
    %v300 = vunpack.c.l.b16 %v213
    %v301 = vunpack.c.l.b16 %v214
    %v302 = vunpack.c.l.b16 %v215
    %v303 = vunpack.c.l.b16 %v216
    %v304 = vunpack.c.l.b16 %v217
    %v305 = vunpack.c.l.b16 %v218
    %v306 = vunpack.c.l.b16 %v219
    %v307 = vunpack.c.l.b16 %v220
    %v308 = vunpack.c.l.b16 %v221
    %v309 = vunpack.c.l.b16 %v222
    %v310 = vpack.c.b16 %v295, %v294
    %v311 = vpack.c.b16 %v297, %v296
    %v312 = vpack.c.b16 %v299, %v298
    %v313 = vpack.c.b16 %v301, %v300
    %v314 = vpack.c.b16 %v303, %v302
    %v315 = vpack.c.b16 %v305, %v304
    %v316 = vpack.c.b16 %v307, %v306
    %v317 = vpack.c.b16 %v309, %v308
    %326 = vmatprep.subr.bf16.mxu0 0
    %327 = vmatpush1.bf16.msra.mxu0 %v310
    %328 = vmatprep.subr.bf16.mxu0 0
    %329 = vmatpush1.bf16.msra.mxu0 %v311
    %330 = vmatprep.subr.bf16.mxu0 0
    %331 = vmatpush1.bf16.msra.mxu0 %v312
    %332 = vmatprep.subr.bf16.mxu0 0
    %333 = vmatpush1.bf16.msra.mxu0 %v313
    %334 = vmatprep.subr.bf16.mxu0 0
    %335 = vmatpush1.bf16.msra.mxu0 %v314
    %336 = vmatprep.subr.bf16.mxu0 0
    %337 = vmatpush1.bf16.msra.mxu0 %v315
    %338 = vmatprep.subr.bf16.mxu0 0
    %339 = vmatpush1.bf16.msra.mxu0 %v316
    %340 = vmatprep.subr.bf16.mxu0 0
    %341 = vmatpush1.bf16.msra.mxu0 %v317
    %342 = vmatprep.subr.bf16.mxu0 0
    %343 = vmatpush1.bf16.msra.mxu0 0
    %344 = vmatprep.subr.bf16.mxu0 0
    %345 = vmatpush1.bf16.msra.mxu0 0
    %346 = vmatprep.subr.bf16.mxu0 0
    %347 = vmatpush1.bf16.msra.mxu0 0
    %348 = vmatprep.subr.bf16.mxu0 0
    %349 = vmatpush1.bf16.msra.mxu0 0
    %350 = vmatprep.subr.bf16.mxu0 0
    %351 = vmatpush1.bf16.msra.mxu0 0
    %352 = vmatprep.subr.bf16.mxu0 0
    %353 = vmatpush1.bf16.msra.mxu0 0
    %354 = vmatprep.subr.bf16.mxu0 0
    %355 = vmatpush1.bf16.msra.mxu0 0
    %356 = vmatprep.subr.bf16.mxu0 0
    %357 = vmatpush1.bf16.msra.mxu0 0
    %358 = vmatprep.mubr.bf16.mxu0 0
    %359 = vmatmul.mubr.bf16.gmra.mrb[0].mxu0 %v262
    %v360 = vpop.f32.mrb[0].mxu0
    %v361 = vadd.f32 %v228, %v360
    %v362 = vpop.f32.mrb[0].mxu0
    %v363 = vpop.f32.mrb[0].mxu0
    %v364 = vadd.f32 %v228, %v363
    %v365 = vpop.f32.mrb[0].mxu0
    %366 = vmatprep.mubr.bf16.mxu0 0
    %367 = vmatmul.mubr.bf16.gmra.mrb[0].mxu0 %v263
    %v368 = vpop.f32.mrb[0].mxu0
    %v369 = vadd.f32 %v228, %v368
    %v370 = vpop.f32.mrb[0].mxu0
    %v371 = vpop.f32.mrb[0].mxu0
    %v372 = vadd.f32 %v228, %v371
    %v373 = vpop.f32.mrb[0].mxu0
    %374 = vmatprep.mubr.bf16.mxu0 0
    %375 = vmatmul.mubr.bf16.gmra.mrb[0].mxu0 %v264
    %v376 = vpop.f32.mrb[0].mxu0
    %v377 = vadd.f32 %v228, %v376
    %v378 = vpop.f32.mrb[0].mxu0
    %v379 = vpop.f32.mrb[0].mxu0
    %v380 = vadd.f32 %v228, %v379
    %v381 = vpop.f32.mrb[0].mxu0
    %382 = vmatprep.mubr.bf16.mxu0 0
    %383 = vmatmul.mubr.bf16.gmra.mrb[0].mxu0 %v265
    %v384 = vpop.f32.mrb[0].mxu0
    %v385 = vadd.f32 %v228, %v384
    %v386 = vpop.f32.mrb[0].mxu0
    %v387 = vpop.f32.mrb[0].mxu0
    %v388 = vadd.f32 %v228, %v387
    %v389 = vpop.f32.mrb[0].mxu0
    %390 = vmatprep.mubr.bf16.mxu0 0
    %391 = vmatmul.mubr.bf16.gmra.mrb[0].mxu0 %v266
    %v392 = vpop.f32.mrb[0].mxu0
    %v393 = vadd.f32 %v228, %v392
    %v394 = vpop.f32.mrb[0].mxu0
    %v395 = vpop.f32.mrb[0].mxu0
    %v396 = vadd.f32 %v228, %v395
    %v397 = vpop.f32.mrb[0].mxu0
    %398 = vmatprep.mubr.bf16.mxu0 0
    %399 = vmatmul.mubr.bf16.gmra.mrb[0].mxu0 %v267
    %v400 = vpop.f32.mrb[0].mxu0
    %v401 = vadd.f32 %v228, %v400
    %v402 = vpop.f32.mrb[0].mxu0
    %v403 = vpop.f32.mrb[0].mxu0
    %v404 = vadd.f32 %v228, %v403
    %v405 = vpop.f32.mrb[0].mxu0
    %406 = vmatprep.mubr.bf16.mxu0 0
    %407 = vmatmul.mubr.bf16.gmra.mrb[0].mxu0 %v268
    %v408 = vpop.f32.mrb[0].mxu0
    %v409 = vadd.f32 %v228, %v408
    %v410 = vpop.f32.mrb[0].mxu0
    %v411 = vpop.f32.mrb[0].mxu0
    %v412 = vadd.f32 %v228, %v411
    %v413 = vpop.f32.mrb[0].mxu0
    %414 = vmatprep.mubr.bf16.mxu0 0
    %415 = vmatmul.mubr.bf16.gmra.mrb[0].mxu0 %v269
    %v416 = vpop.f32.mrb[0].mxu0
    %v417 = vadd.f32 %v228, %v416
    %v418 = vpop.f32.mrb[0].mxu0
    %v419 = vpop.f32.mrb[0].mxu0
    %v420 = vadd.f32 %v228, %v419
    %v421 = vpop.f32.mrb[0].mxu0
    %422 = vdwg.mxu0
    %v423 = vmax.f32 %v361, 0.0
    %v424 = vmax.f32 %v364, 0.0
    %v425 = vmax.f32 %v369, 0.0
    %v426 = vmax.f32 %v372, 0.0
    %v427 = vmax.f32 %v377, 0.0
    %v428 = vmax.f32 %v380, 0.0
    %v429 = vmax.f32 %v385, 0.0
    %v430 = vmax.f32 %v388, 0.0
    %v431 = vmax.f32 %v393, 0.0
    %v432 = vmax.f32 %v396, 0.0
    %v433 = vmax.f32 %v401, 0.0
    %v434 = vmax.f32 %v404, 0.0
    %v435 = vmax.f32 %v409, 0.0
    %v436 = vmax.f32 %v412, 0.0
    %v437 = vmax.f32 %v417, 0.0
    %v438 = vmax.f32 %v420, 0.0
    %v439 = vpack.c.bf16 %v424, %v423
    %v440 = vpack.c.bf16 %v426, %v425
    %v441 = vpack.c.bf16 %v428, %v427
    %v442 = vpack.c.bf16 %v430, %v429
    %v443 = vpack.c.bf16 %v432, %v431
    %v444 = vpack.c.bf16 %v434, %v433
    %v445 = vpack.c.bf16 %v436, %v435
    %v446 = vpack.c.bf16 %v438, %v437
    %v447 = vld [vmem:[#allocation8] sm:$0xf]
    %v448 = vld [vmem:[#allocation8 + $0x4] sm:$0xf]
    %v449 = vld [vmem:[#allocation8 + $0x8] sm:$0xf]
    %v450 = vld [vmem:[#allocation8 + $0xc] sm:$0xf]
    %v451 = vld [vmem:[#allocation8 + $0x10] sm:$0xf]
    %v452 = vld [vmem:[#allocation8 + $0x14] sm:$0xf]
    %v453 = vld [vmem:[#allocation8 + $0x18] sm:$0xf]
    %v454 = vld [vmem:[#allocation8 + $0x1c] sm:$0xf]
    %v455 = vld [vmem:[#allocation8 + $0x20] sm:$0xf]
    %v456 = vld [vmem:[#allocation8 + $0x24] sm:$0xf]
    %v457 = vld [vmem:[#allocation8 + $0x28] sm:$0xf]
    %v458 = vld [vmem:[#allocation8 + $0x2c] sm:$0xf]
    %v459 = vld [vmem:[#allocation8 + $0x30] sm:$0xf]
    %v460 = vld [vmem:[#allocation8 + $0x34] sm:$0xf]
    %v461 = vld [vmem:[#allocation8 + $0x38] sm:$0xf]
    %v462 = vld [vmem:[#allocation8 + $0x3c] sm:$0xf]
    %v463 = vld [vmem:[%s5] sm:$0x1]
    %v465 = vlaneseq
    %v466 = vshrl.u32 %v465, 7
    %v467 = vsub.s32 0, %v466
    %v468 = vrot.slane %v463, %v467
    %v486 = vunpack.c.l.b16 %v447
    %v487 = vunpack.c.l.b16 %v448
    %v488 = vunpack.c.l.b16 %v449
    %v489 = vunpack.c.l.b16 %v450
    %v490 = vunpack.c.l.b16 %v451
    %v491 = vunpack.c.l.b16 %v452
    %v492 = vunpack.c.l.b16 %v453
    %v493 = vunpack.c.l.b16 %v454
    %v494 = vunpack.c.l.b16 %v455
    %v495 = vunpack.c.l.b16 %v456
    %v496 = vunpack.c.l.b16 %v457
    %v497 = vunpack.c.l.b16 %v458
    %v498 = vunpack.c.l.b16 %v459
    %v499 = vunpack.c.l.b16 %v460
    %v500 = vunpack.c.l.b16 %v461
    %v501 = vunpack.c.l.b16 %v462
    %v502 = vpack.c.b16 %v487, %v486
    %v503 = vpack.c.b16 %v489, %v488
    %v504 = vpack.c.b16 %v491, %v490
    %v505 = vpack.c.b16 %v493, %v492
    %v506 = vpack.c.b16 %v495, %v494
    %v507 = vpack.c.b16 %v497, %v496
    %v508 = vpack.c.b16 %v499, %v498
    %v509 = vpack.c.b16 %v501, %v500
    %518 = vmatprep.subr.bf16.mxu0 0
    %519 = vmatpush1.bf16.msra.mxu0 %v502
    %520 = vmatprep.subr.bf16.mxu0 0
    %521 = vmatpush1.bf16.msra.mxu0 %v503
    %522 = vmatprep.subr.bf16.mxu0 0
    %523 = vmatpush1.bf16.msra.mxu0 %v504
    %524 = vmatprep.subr.bf16.mxu0 0
    %525 = vmatpush1.bf16.msra.mxu0 %v505
    %526 = vmatprep.subr.bf16.mxu0 0
    %527 = vmatpush1.bf16.msra.mxu0 %v506
    %528 = vmatprep.subr.bf16.mxu0 0
    %529 = vmatpush1.bf16.msra.mxu0 %v507
    %530 = vmatprep.subr.bf16.mxu0 0
    %531 = vmatpush1.bf16.msra.mxu0 %v508
    %532 = vmatprep.subr.bf16.mxu0 0
    %533 = vmatpush1.bf16.msra.mxu0 %v509
    %534 = vmatprep.subr.bf16.mxu0 0
    %535 = vmatpush1.bf16.msra.mxu0 0
    %536 = vmatprep.subr.bf16.mxu0 0
    %537 = vmatpush1.bf16.msra.mxu0 0
    %538 = vmatprep.subr.bf16.mxu0 0
    %539 = vmatpush1.bf16.msra.mxu0 0
    %540 = vmatprep.subr.bf16.mxu0 0
    %541 = vmatpush1.bf16.msra.mxu0 0
    %542 = vmatprep.subr.bf16.mxu0 0
    %543 = vmatpush1.bf16.msra.mxu0 0
    %544 = vmatprep.subr.bf16.mxu0 0
    %545 = vmatpush1.bf16.msra.mxu0 0
    %546 = vmatprep.subr.bf16.mxu0 0
    %547 = vmatpush1.bf16.msra.mxu0 0
    %548 = vmatprep.subr.bf16.mxu0 0
    %549 = vmatpush1.bf16.msra.mxu0 0
    %550 = vmatprep.mubr.bf16.mxu0 0
    %551 = vmatmul.mubr.bf16.gmra.mrb[0].mxu0 %v439
    %v552 = vpop.f32.mrb[0].mxu0
    %v553 = vadd.f32 %v468, %v552
    %v554 = vpop.f32.mrb[0].mxu0
    %v555 = vpop.f32.mrb[0].mxu0
    %v556 = vadd.f32 %v468, %v555
    %v557 = vpop.f32.mrb[0].mxu0
    %558 = vmatprep.mubr.bf16.mxu0 0
    %559 = vmatmul.mubr.bf16.gmra.mrb[0].mxu0 %v440
    %v560 = vpop.f32.mrb[0].mxu0
    %v561 = vadd.f32 %v468, %v560
    %v562 = vpop.f32.mrb[0].mxu0
    %v563 = vpop.f32.mrb[0].mxu0
    %v564 = vadd.f32 %v468, %v563
    %v565 = vpop.f32.mrb[0].mxu0
    %566 = vmatprep.mubr.bf16.mxu0 0
    %567 = vmatmul.mubr.bf16.gmra.mrb[0].mxu0 %v441
    %v568 = vpop.f32.mrb[0].mxu0
    %v569 = vadd.f32 %v468, %v568
    %v570 = vpop.f32.mrb[0].mxu0
    %v571 = vpop.f32.mrb[0].mxu0
    %v572 = vadd.f32 %v468, %v571
    %v573 = vpop.f32.mrb[0].mxu0
    %574 = vmatprep.mubr.bf16.mxu0 0
    %575 = vmatmul.mubr.bf16.gmra.mrb[0].mxu0 %v442
    %v576 = vpop.f32.mrb[0].mxu0
    %v577 = vadd.f32 %v468, %v576
    %v578 = vpop.f32.mrb[0].mxu0
    %v579 = vpop.f32.mrb[0].mxu0
    %v580 = vadd.f32 %v468, %v579
    %v581 = vpop.f32.mrb[0].mxu0
    %582 = vmatprep.mubr.bf16.mxu0 0
    %583 = vmatmul.mubr.bf16.gmra.mrb[0].mxu0 %v443
    %v584 = vpop.f32.mrb[0].mxu0
    %v585 = vadd.f32 %v468, %v584
    %v586 = vpop.f32.mrb[0].mxu0
    %v587 = vpop.f32.mrb[0].mxu0
    %v588 = vadd.f32 %v468, %v587
    %v589 = vpop.f32.mrb[0].mxu0
    %590 = vmatprep.mubr.bf16.mxu0 0
    %591 = vmatmul.mubr.bf16.gmra.mrb[0].mxu0 %v444
    %v592 = vpop.f32.mrb[0].mxu0
    %v593 = vadd.f32 %v468, %v592
    %v594 = vpop.f32.mrb[0].mxu0
    %v595 = vpop.f32.mrb[0].mxu0
    %v596 = vadd.f32 %v468, %v595
    %v597 = vpop.f32.mrb[0].mxu0
    %598 = vmatprep.mubr.bf16.mxu0 0
    %599 = vmatmul.mubr.bf16.gmra.mrb[0].mxu0 %v445
    %v600 = vpop.f32.mrb[0].mxu0
    %v601 = vadd.f32 %v468, %v600
    %v602 = vpop.f32.mrb[0].mxu0
    %v603 = vpop.f32.mrb[0].mxu0
    %v604 = vadd.f32 %v468, %v603
    %v605 = vpop.f32.mrb[0].mxu0
    %606 = vmatprep.mubr.bf16.mxu0 0
    %607 = vmatmul.mubr.bf16.gmra.mrb[0].mxu0 %v446
    %v608 = vpop.f32.mrb[0].mxu0
    %v609 = vadd.f32 %v468, %v608
    %v610 = vpop.f32.mrb[0].mxu0
    %v611 = vpop.f32.mrb[0].mxu0
    %v612 = vadd.f32 %v468, %v611
    %v613 = vpop.f32.mrb[0].mxu0
    %614 = vdwg.mxu0
    %615 = vst [vmem:[#allocation17] sm:$0xff] %v553
    %616 = vst [vmem:[#allocation17 + $0x8] sm:$0xff] %v556
    %617 = vst [vmem:[#allocation17 + $0x10] sm:$0xff] %v561
    %618 = vst [vmem:[#allocation17 + $0x18] sm:$0xff] %v564
    %619 = vst [vmem:[#allocation17 + $0x20] sm:$0xff] %v569
    %620 = vst [vmem:[#allocation17 + $0x28] sm:$0xff] %v572
    %621 = vst [vmem:[#allocation17 + $0x30] sm:$0xff] %v577
    %622 = vst [vmem:[#allocation17 + $0x38] sm:$0xff] %v580
    %623 = vst [vmem:[#allocation17 + $0x40] sm:$0xff] %v585
    %624 = vst [vmem:[#allocation17 + $0x48] sm:$0xff] %v588
    %625 = vst [vmem:[#allocation17 + $0x50] sm:$0xff] %v593
    %626 = vst [vmem:[#allocation17 + $0x58] sm:$0xff] %v596
    %627 = vst [vmem:[#allocation17 + $0x60] sm:$0xff] %v601
    %628 = vst [vmem:[#allocation17 + $0x68] sm:$0xff] %v604
    %629 = vst [vmem:[#allocation17 + $0x70] sm:$0xff] %v609
    %630 = vst [vmem:[#allocation17 + $0x78] sm:$0xff] %v612
    %v631 = vld [vmem:[#allocation10] sm:$0xf]
    %v632 = vld [vmem:[#allocation10 + $0x4] sm:$0xf]
    %v633 = vld [vmem:[#allocation10 + $0x8] sm:$0xf]
    %v634 = vld [vmem:[#allocation10 + $0xc] sm:$0xf]
    %v635 = vld [vmem:[#allocation10 + $0x10] sm:$0xf]
    %v636 = vld [vmem:[#allocation10 + $0x14] sm:$0xf]
    %v637 = vld [vmem:[#allocation10 + $0x18] sm:$0xf]
    %v638 = vld [vmem:[#allocation10 + $0x1c] sm:$0xf]
    %v639 = vld [vmem:[#allocation10 + $0x20] sm:$0xf]
    %v640 = vld [vmem:[#allocation10 + $0x24] sm:$0xf]
    %v641 = vld [vmem:[#allocation10 + $0x28] sm:$0xf]
    %v642 = vld [vmem:[#allocation10 + $0x2c] sm:$0xf]
    %v643 = vld [vmem:[#allocation10 + $0x30] sm:$0xf]
    %v644 = vld [vmem:[#allocation10 + $0x34] sm:$0xf]
    %v645 = vld [vmem:[#allocation10 + $0x38] sm:$0xf]
    %v646 = vld [vmem:[#allocation10 + $0x3c] sm:$0xf]
    %v647 = vld [vmem:[%s7] sm:$0x1]
    %v664 = vunpack.c.l.b16 %v631
    %v665 = vunpack.c.l.b16 %v632
    %v666 = vunpack.c.l.b16 %v633
    %v667 = vunpack.c.l.b16 %v634
    %v668 = vunpack.c.l.b16 %v635
    %v669 = vunpack.c.l.b16 %v636
    %v670 = vunpack.c.l.b16 %v637
    %v671 = vunpack.c.l.b16 %v638
    %v672 = vunpack.c.l.b16 %v639
    %v673 = vunpack.c.l.b16 %v640
    %v674 = vunpack.c.l.b16 %v641
    %v675 = vunpack.c.l.b16 %v642
    %v676 = vunpack.c.l.b16 %v643
    %v677 = vunpack.c.l.b16 %v644
    %v678 = vunpack.c.l.b16 %v645
    %v679 = vunpack.c.l.b16 %v646
    %v680 = vpack.c.b16 %v665, %v664
    %v681 = vpack.c.b16 %v667, %v666
    %v682 = vpack.c.b16 %v669, %v668
    %v683 = vpack.c.b16 %v671, %v670
    %v684 = vpack.c.b16 %v673, %v672
    %v685 = vpack.c.b16 %v675, %v674
    %v686 = vpack.c.b16 %v677, %v676
    %v687 = vpack.c.b16 %v679, %v678
    %696 = vmatprep.subr.bf16.mxu0 0
    %697 = vmatpush1.bf16.msra.mxu0 %v680
    %698 = vmatprep.subr.bf16.mxu0 0
    %699 = vmatpush1.bf16.msra.mxu0 %v681
    %700 = vmatprep.subr.bf16.mxu0 0
    %701 = vmatpush1.bf16.msra.mxu0 %v682
    %702 = vmatprep.subr.bf16.mxu0 0
    %703 = vmatpush1.bf16.msra.mxu0 %v683
    %704 = vmatprep.subr.bf16.mxu0 0
    %705 = vmatpush1.bf16.msra.mxu0 %v684
    %706 = vmatprep.subr.bf16.mxu0 0
    %707 = vmatpush1.bf16.msra.mxu0 %v685
    %708 = vmatprep.subr.bf16.mxu0 0
    %709 = vmatpush1.bf16.msra.mxu0 %v686
    %710 = vmatprep.subr.bf16.mxu0 0
    %711 = vmatpush1.bf16.msra.mxu0 %v687
    %712 = vmatprep.subr.bf16.mxu0 0
    %713 = vmatpush1.bf16.msra.mxu0 0
    %714 = vmatprep.subr.bf16.mxu0 0
    %715 = vmatpush1.bf16.msra.mxu0 0
    %716 = vmatprep.subr.bf16.mxu0 0
    %717 = vmatpush1.bf16.msra.mxu0 0
    %718 = vmatprep.subr.bf16.mxu0 0
    %719 = vmatpush1.bf16.msra.mxu0 0
    %720 = vmatprep.subr.bf16.mxu0 0
    %721 = vmatpush1.bf16.msra.mxu0 0
    %722 = vmatprep.subr.bf16.mxu0 0
    %723 = vmatpush1.bf16.msra.mxu0 0
    %724 = vmatprep.subr.bf16.mxu0 0
    %725 = vmatpush1.bf16.msra.mxu0 0
    %726 = vmatprep.subr.bf16.mxu0 0
    %727 = vmatpush1.bf16.msra.mxu0 0
    %728 = vmatprep.mubr.bf16.mxu0 0
    %729 = vmatmul.mubr.bf16.gmra.mrb[0].mxu0 %v262
    %v730 = vpop.f32.mrb[0].mxu0
    %v731 = vadd.f32 0.0, %v730
    %v732 = vpop.f32.mrb[0].mxu0
    %v733 = vpop.f32.mrb[0].mxu0
    %v734 = vadd.f32 0.0, %v733
    %v735 = vpop.f32.mrb[0].mxu0
    %736 = vmatprep.mubr.bf16.mxu0 0
    %737 = vmatmul.mubr.bf16.gmra.mrb[0].mxu0 %v263
    %v738 = vpop.f32.mrb[0].mxu0
    %v739 = vadd.f32 0.0, %v738
    %v740 = vpop.f32.mrb[0].mxu0
    %v741 = vpop.f32.mrb[0].mxu0
    %v742 = vadd.f32 0.0, %v741
    %v743 = vpop.f32.mrb[0].mxu0
    %744 = vmatprep.mubr.bf16.mxu0 0
    %745 = vmatmul.mubr.bf16.gmra.mrb[0].mxu0 %v264
    %v746 = vpop.f32.mrb[0].mxu0
    %v747 = vadd.f32 0.0, %v746
    %v748 = vpop.f32.mrb[0].mxu0
    %v749 = vpop.f32.mrb[0].mxu0
    %v750 = vadd.f32 0.0, %v749
    %v751 = vpop.f32.mrb[0].mxu0
    %752 = vmatprep.mubr.bf16.mxu0 0
    %753 = vmatmul.mubr.bf16.gmra.mrb[0].mxu0 %v265
    %v754 = vpop.f32.mrb[0].mxu0
    %v755 = vadd.f32 0.0, %v754
    %v756 = vpop.f32.mrb[0].mxu0
    %v757 = vpop.f32.mrb[0].mxu0
    %v758 = vadd.f32 0.0, %v757
    %v759 = vpop.f32.mrb[0].mxu0
    %760 = vmatprep.mubr.bf16.mxu0 0
    %761 = vmatmul.mubr.bf16.gmra.mrb[0].mxu0 %v266
    %v762 = vpop.f32.mrb[0].mxu0
    %v763 = vadd.f32 0.0, %v762
    %v764 = vpop.f32.mrb[0].mxu0
    %v765 = vpop.f32.mrb[0].mxu0
    %v766 = vadd.f32 0.0, %v765
    %v767 = vpop.f32.mrb[0].mxu0
    %768 = vmatprep.mubr.bf16.mxu0 0
    %769 = vmatmul.mubr.bf16.gmra.mrb[0].mxu0 %v267
    %v770 = vpop.f32.mrb[0].mxu0
    %v771 = vadd.f32 0.0, %v770
    %v772 = vpop.f32.mrb[0].mxu0
    %v773 = vpop.f32.mrb[0].mxu0
    %v774 = vadd.f32 0.0, %v773
    %v775 = vpop.f32.mrb[0].mxu0
    %776 = vmatprep.mubr.bf16.mxu0 0
    %777 = vmatmul.mubr.bf16.gmra.mrb[0].mxu0 %v268
    %v778 = vpop.f32.mrb[0].mxu0
    %v779 = vadd.f32 0.0, %v778
    %v780 = vpop.f32.mrb[0].mxu0
    %v781 = vpop.f32.mrb[0].mxu0
    %v782 = vadd.f32 0.0, %v781
    %v783 = vpop.f32.mrb[0].mxu0
    %784 = vmatprep.mubr.bf16.mxu0 0
    %785 = vmatmul.mubr.bf16.gmra.mrb[0].mxu0 %v269
    %v786 = vpop.f32.mrb[0].mxu0
    %v787 = vadd.f32 0.0, %v786
    %v788 = vpop.f32.mrb[0].mxu0
    %v789 = vpop.f32.mrb[0].mxu0
    %v790 = vadd.f32 0.0, %v789
    %v791 = vpop.f32.mrb[0].mxu0
    %792 = vdwg.mxu0
    %v793 = vpack.c.bf16 %v734, %v731
    %v794 = vpack.c.bf16 %v742, %v739
    %v795 = vpack.c.bf16 %v750, %v747
    %v796 = vpack.c.bf16 %v758, %v755
    %v797 = vpack.c.bf16 %v766, %v763
    %v798 = vpack.c.bf16 %v774, %v771
    %v799 = vpack.c.bf16 %v782, %v779
    %v800 = vpack.c.bf16 %v790, %v787
    %v802 = vlaneseq
    %v803 = vshrl.u32 %v802, 7
    %v804 = vsub.s32 0, %v803
    %v805 = vrot.slane %v647, %v804
    %v823 = vunpack.c.l.b16 %v191
    %v824 = vunpack.c.l.b16 %v192
    %v825 = vunpack.c.l.b16 %v193
    %v826 = vunpack.c.l.b16 %v194
    %v827 = vunpack.c.l.b16 %v195
    %v828 = vunpack.c.l.b16 %v196
    %v829 = vunpack.c.l.b16 %v197
    %v830 = vunpack.c.l.b16 %v198
    %v831 = vunpack.c.l.b16 %v199
    %v832 = vunpack.c.l.b16 %v200
    %v833 = vunpack.c.l.b16 %v201
    %v834 = vunpack.c.l.b16 %v202
    %v835 = vunpack.c.l.b16 %v203
    %v836 = vunpack.c.l.b16 %v204
    %v837 = vunpack.c.l.b16 %v205
    %v838 = vunpack.c.l.b16 %v206
    %v839 = vpack.c.b16 %v824, %v823
    %v840 = vpack.c.b16 %v826, %v825
    %v841 = vpack.c.b16 %v828, %v827
    %v842 = vpack.c.b16 %v830, %v829
    %v843 = vpack.c.b16 %v832, %v831
    %v844 = vpack.c.b16 %v834, %v833
    %v845 = vpack.c.b16 %v836, %v835
    %v846 = vpack.c.b16 %v838, %v837
    %855 = vmatprep.subr.bf16.mxu0 0
    %856 = vmatpush1.bf16.msra.mxu0 %v793
    %857 = vmatprep.subr.bf16.mxu0 0
    %858 = vmatpush1.bf16.msra.mxu0 %v794
    %859 = vmatprep.subr.bf16.mxu0 0
    %860 = vmatpush1.bf16.msra.mxu0 %v795
    %861 = vmatprep.subr.bf16.mxu0 0
    %862 = vmatpush1.bf16.msra.mxu0 %v796
    %863 = vmatprep.subr.bf16.mxu0 0
    %864 = vmatpush1.bf16.msra.mxu0 %v797
    %865 = vmatprep.subr.bf16.mxu0 0
    %866 = vmatpush1.bf16.msra.mxu0 %v798
    %867 = vmatprep.subr.bf16.mxu0 0
    %868 = vmatpush1.bf16.msra.mxu0 %v799
    %869 = vmatprep.subr.bf16.mxu0 0
    %870 = vmatpush1.bf16.msra.mxu0 %v800
    %871 = vmatprep.subr.bf16.mxu0 0
    %872 = vmatpush1.bf16.msra.mxu0 0
    %873 = vmatprep.subr.bf16.mxu0 0
    %874 = vmatpush1.bf16.msra.mxu0 0
    %875 = vmatprep.subr.bf16.mxu0 0
    %876 = vmatpush1.bf16.msra.mxu0 0
    %877 = vmatprep.subr.bf16.mxu0 0
    %878 = vmatpush1.bf16.msra.mxu0 0
    %879 = vmatprep.subr.bf16.mxu0 0
    %880 = vmatpush1.bf16.msra.mxu0 0
    %881 = vmatprep.subr.bf16.mxu0 0
    %882 = vmatpush1.bf16.msra.mxu0 0
    %883 = vmatprep.subr.bf16.mxu0 0
    %884 = vmatpush1.bf16.msra.mxu0 0
    %885 = vmatprep.subr.bf16.mxu0 0
    %886 = vmatpush1.bf16.msra.mxu0 0
    %887 = vmatprep.mubr.bf16.mxu0 0
    %888 = vmatmul.mubr.bf16.gmra.mrb[0].mxu0 %v839
    %v889 = vpop.f32.mrb[0].mxu0
    %v890 = vadd.f32 %v805, %v889
    %v891 = vpop.f32.mrb[0].mxu0
    %v892 = vpop.f32.mrb[0].mxu0
    %v893 = vadd.f32 %v805, %v892
    %v894 = vpop.f32.mrb[0].mxu0
    %895 = vmatprep.mubr.bf16.mxu0 0
    %896 = vmatmul.mubr.bf16.gmra.mrb[0].mxu0 %v840
    %v897 = vpop.f32.mrb[0].mxu0
    %v898 = vadd.f32 %v805, %v897
    %v899 = vpop.f32.mrb[0].mxu0
    %v900 = vpop.f32.mrb[0].mxu0
    %v901 = vadd.f32 %v805, %v900
    %v902 = vpop.f32.mrb[0].mxu0
    %903 = vmatprep.mubr.bf16.mxu0 0
    %904 = vmatmul.mubr.bf16.gmra.mrb[0].mxu0 %v841
    %v905 = vpop.f32.mrb[0].mxu0
    %v906 = vadd.f32 %v805, %v905
    %v907 = vpop.f32.mrb[0].mxu0
    %v908 = vpop.f32.mrb[0].mxu0
    %v909 = vadd.f32 %v805, %v908
    %v910 = vpop.f32.mrb[0].mxu0
    %911 = vmatprep.mubr.bf16.mxu0 0
    %912 = vmatmul.mubr.bf16.gmra.mrb[0].mxu0 %v842
    %v913 = vpop.f32.mrb[0].mxu0
    %v914 = vadd.f32 %v805, %v913
    %v915 = vpop.f32.mrb[0].mxu0
    %v916 = vpop.f32.mrb[0].mxu0
    %v917 = vadd.f32 %v805, %v916
    %v918 = vpop.f32.mrb[0].mxu0
    %919 = vmatprep.mubr.bf16.mxu0 0
    %920 = vmatmul.mubr.bf16.gmra.mrb[0].mxu0 %v843
    %v921 = vpop.f32.mrb[0].mxu0
    %v922 = vadd.f32 %v805, %v921
    %v923 = vpop.f32.mrb[0].mxu0
    %v924 = vpop.f32.mrb[0].mxu0
    %v925 = vadd.f32 %v805, %v924
    %v926 = vpop.f32.mrb[0].mxu0
    %927 = vmatprep.mubr.bf16.mxu0 0
    %928 = vmatmul.mubr.bf16.gmra.mrb[0].mxu0 %v844
    %v929 = vpop.f32.mrb[0].mxu0
    %v930 = vadd.f32 %v805, %v929
    %v931 = vpop.f32.mrb[0].mxu0
    %v932 = vpop.f32.mrb[0].mxu0
    %v933 = vadd.f32 %v805, %v932
    %v934 = vpop.f32.mrb[0].mxu0
    %935 = vmatprep.mubr.bf16.mxu0 0
    %936 = vmatmul.mubr.bf16.gmra.mrb[0].mxu0 %v845
    %v937 = vpop.f32.mrb[0].mxu0
    %v938 = vadd.f32 %v805, %v937
    %v939 = vpop.f32.mrb[0].mxu0
    %v940 = vpop.f32.mrb[0].mxu0
    %v941 = vadd.f32 %v805, %v940
    %v942 = vpop.f32.mrb[0].mxu0
    %943 = vmatprep.mubr.bf16.mxu0 0
    %944 = vmatmul.mubr.bf16.gmra.mrb[0].mxu0 %v846
    %v945 = vpop.f32.mrb[0].mxu0
    %v946 = vadd.f32 %v805, %v945
    %v947 = vpop.f32.mrb[0].mxu0
    %v948 = vpop.f32.mrb[0].mxu0
    %v949 = vadd.f32 %v805, %v948
    %v950 = vpop.f32.mrb[0].mxu0
    %951 = vdwg.mxu0
    %v952 = vmax.f32 %v890, 0.0
    %v953 = vmax.f32 %v893, 0.0
    %v954 = vmax.f32 %v898, 0.0
    %v955 = vmax.f32 %v901, 0.0
    %v956 = vmax.f32 %v906, 0.0
    %v957 = vmax.f32 %v909, 0.0
    %v958 = vmax.f32 %v914, 0.0
    %v959 = vmax.f32 %v917, 0.0
    %v960 = vmax.f32 %v922, 0.0
    %v961 = vmax.f32 %v925, 0.0
    %v962 = vmax.f32 %v930, 0.0
    %v963 = vmax.f32 %v933, 0.0
    %v964 = vmax.f32 %v938, 0.0
    %v965 = vmax.f32 %v941, 0.0
    %v966 = vmax.f32 %v946, 0.0
    %v967 = vmax.f32 %v949, 0.0
    %v968 = vpack.c.bf16 %v953, %v952
    %v969 = vpack.c.bf16 %v955, %v954
    %v970 = vpack.c.bf16 %v957, %v956
    %v971 = vpack.c.bf16 %v959, %v958
    %v972 = vpack.c.bf16 %v961, %v960
    %v973 = vpack.c.bf16 %v963, %v962
    %v974 = vpack.c.bf16 %v965, %v964
    %v975 = vpack.c.bf16 %v967, %v966
    %v976 = vld [vmem:[#allocation11] sm:$0xf]
    %v977 = vld [vmem:[#allocation11 + $0x4] sm:$0xf]
    %v978 = vld [vmem:[#allocation11 + $0x8] sm:$0xf]
    %v979 = vld [vmem:[#allocation11 + $0xc] sm:$0xf]
    %v980 = vld [vmem:[#allocation11 + $0x10] sm:$0xf]
    %v981 = vld [vmem:[#allocation11 + $0x14] sm:$0xf]
    %v982 = vld [vmem:[#allocation11 + $0x18] sm:$0xf]
    %v983 = vld [vmem:[#allocation11 + $0x1c] sm:$0xf]
    %v984 = vld [vmem:[#allocation11 + $0x20] sm:$0xf]
    %v985 = vld [vmem:[#allocation11 + $0x24] sm:$0xf]
    %v986 = vld [vmem:[#allocation11 + $0x28] sm:$0xf]
    %v987 = vld [vmem:[#allocation11 + $0x2c] sm:$0xf]
    %v988 = vld [vmem:[#allocation11 + $0x30] sm:$0xf]
    %v989 = vld [vmem:[#allocation11 + $0x34] sm:$0xf]
    %v990 = vld [vmem:[#allocation11 + $0x38] sm:$0xf]
    %v991 = vld [vmem:[#allocation11 + $0x3c] sm:$0xf]
    %v992 = vld [vmem:[%s9] sm:$0x1]
    %v1009 = vunpack.c.l.b16 %v976
    %v1010 = vunpack.c.l.b16 %v977
    %v1011 = vunpack.c.l.b16 %v978
    %v1012 = vunpack.c.l.b16 %v979
    %v1013 = vunpack.c.l.b16 %v980
    %v1014 = vunpack.c.l.b16 %v981
    %v1015 = vunpack.c.l.b16 %v982
    %v1016 = vunpack.c.l.b16 %v983
    %v1017 = vunpack.c.l.b16 %v984
    %v1018 = vunpack.c.l.b16 %v985
    %v1019 = vunpack.c.l.b16 %v986
    %v1020 = vunpack.c.l.b16 %v987
    %v1021 = vunpack.c.l.b16 %v988
    %v1022 = vunpack.c.l.b16 %v989
    %v1023 = vunpack.c.l.b16 %v990
    %v1024 = vunpack.c.l.b16 %v991
    %v1025 = vpack.c.b16 %v1010, %v1009
    %v1026 = vpack.c.b16 %v1012, %v1011
    %v1027 = vpack.c.b16 %v1014, %v1013
    %v1028 = vpack.c.b16 %v1016, %v1015
    %v1029 = vpack.c.b16 %v1018, %v1017
    %v1030 = vpack.c.b16 %v1020, %v1019
    %v1031 = vpack.c.b16 %v1022, %v1021
    %v1032 = vpack.c.b16 %v1024, %v1023
    %1041 = vmatprep.subr.bf16.mxu0 0
    %1042 = vmatpush1.bf16.msra.mxu0 %v1025
    %1043 = vmatprep.subr.bf16.mxu0 0
    %1044 = vmatpush1.bf16.msra.mxu0 %v1026
    %1045 = vmatprep.subr.bf16.mxu0 0
    %1046 = vmatpush1.bf16.msra.mxu0 %v1027
    %1047 = vmatprep.subr.bf16.mxu0 0
    %1048 = vmatpush1.bf16.msra.mxu0 %v1028
    %1049 = vmatprep.subr.bf16.mxu0 0
    %1050 = vmatpush1.bf16.msra.mxu0 %v1029
    %1051 = vmatprep.subr.bf16.mxu0 0
    %1052 = vmatpush1.bf16.msra.mxu0 %v1030
    %1053 = vmatprep.subr.bf16.mxu0 0
    %1054 = vmatpush1.bf16.msra.mxu0 %v1031
    %1055 = vmatprep.subr.bf16.mxu0 0
    %1056 = vmatpush1.bf16.msra.mxu0 %v1032
    %1057 = vmatprep.subr.bf16.mxu0 0
    %1058 = vmatpush1.bf16.msra.mxu0 0
    %1059 = vmatprep.subr.bf16.mxu0 0
    %1060 = vmatpush1.bf16.msra.mxu0 0
    %1061 = vmatprep.subr.bf16.mxu0 0
    %1062 = vmatpush1.bf16.msra.mxu0 0
    %1063 = vmatprep.subr.bf16.mxu0 0
    %1064 = vmatpush1.bf16.msra.mxu0 0
    %1065 = vmatprep.subr.bf16.mxu0 0
    %1066 = vmatpush1.bf16.msra.mxu0 0
    %1067 = vmatprep.subr.bf16.mxu0 0
    %1068 = vmatpush1.bf16.msra.mxu0 0
    %1069 = vmatprep.subr.bf16.mxu0 0
    %1070 = vmatpush1.bf16.msra.mxu0 0
    %1071 = vmatprep.subr.bf16.mxu0 0
    %1072 = vmatpush1.bf16.msra.mxu0 0
    %1073 = vmatprep.mubr.bf16.mxu0 0
    %1074 = vmatmul.mubr.bf16.gmra.mrb[0].mxu0 %v968
    %v1075 = vpop.f32.mrb[0].mxu0
    %v1076 = vadd.f32 0.0, %v1075
    %v1077 = vpop.f32.mrb[0].mxu0
    %v1078 = vpop.f32.mrb[0].mxu0
    %v1079 = vadd.f32 0.0, %v1078
    %v1080 = vpop.f32.mrb[0].mxu0
    %1081 = vmatprep.mubr.bf16.mxu0 0
    %1082 = vmatmul.mubr.bf16.gmra.mrb[0].mxu0 %v969
    %v1083 = vpop.f32.mrb[0].mxu0
    %v1084 = vadd.f32 0.0, %v1083
    %v1085 = vpop.f32.mrb[0].mxu0
    %v1086 = vpop.f32.mrb[0].mxu0
    %v1087 = vadd.f32 0.0, %v1086
    %v1088 = vpop.f32.mrb[0].mxu0
    %1089 = vmatprep.mubr.bf16.mxu0 0
    %1090 = vmatmul.mubr.bf16.gmra.mrb[0].mxu0 %v970
    %v1091 = vpop.f32.mrb[0].mxu0
    %v1092 = vadd.f32 0.0, %v1091
    %v1093 = vpop.f32.mrb[0].mxu0
    %v1094 = vpop.f32.mrb[0].mxu0
    %v1095 = vadd.f32 0.0, %v1094
    %v1096 = vpop.f32.mrb[0].mxu0
    %1097 = vmatprep.mubr.bf16.mxu0 0
    %1098 = vmatmul.mubr.bf16.gmra.mrb[0].mxu0 %v971
    %v1099 = vpop.f32.mrb[0].mxu0
    %v1100 = vadd.f32 0.0, %v1099
    %v1101 = vpop.f32.mrb[0].mxu0
    %v1102 = vpop.f32.mrb[0].mxu0
    %v1103 = vadd.f32 0.0, %v1102
    %v1104 = vpop.f32.mrb[0].mxu0
    %1105 = vmatprep.mubr.bf16.mxu0 0
    %1106 = vmatmul.mubr.bf16.gmra.mrb[0].mxu0 %v972
    %v1107 = vpop.f32.mrb[0].mxu0
    %v1108 = vadd.f32 0.0, %v1107
    %v1109 = vpop.f32.mrb[0].mxu0
    %v1110 = vpop.f32.mrb[0].mxu0
    %v1111 = vadd.f32 0.0, %v1110
    %v1112 = vpop.f32.mrb[0].mxu0
    %1113 = vmatprep.mubr.bf16.mxu0 0
    %1114 = vmatmul.mubr.bf16.gmra.mrb[0].mxu0 %v973
    %v1115 = vpop.f32.mrb[0].mxu0
    %v1116 = vadd.f32 0.0, %v1115
    %v1117 = vpop.f32.mrb[0].mxu0
    %v1118 = vpop.f32.mrb[0].mxu0
    %v1119 = vadd.f32 0.0, %v1118
    %v1120 = vpop.f32.mrb[0].mxu0
    %1121 = vmatprep.mubr.bf16.mxu0 0
    %1122 = vmatmul.mubr.bf16.gmra.mrb[0].mxu0 %v974
    %v1123 = vpop.f32.mrb[0].mxu0
    %v1124 = vadd.f32 0.0, %v1123
    %v1125 = vpop.f32.mrb[0].mxu0
    %v1126 = vpop.f32.mrb[0].mxu0
    %v1127 = vadd.f32 0.0, %v1126
    %v1128 = vpop.f32.mrb[0].mxu0
    %1129 = vmatprep.mubr.bf16.mxu0 0
    %1130 = vmatmul.mubr.bf16.gmra.mrb[0].mxu0 %v975
    %v1131 = vpop.f32.mrb[0].mxu0
    %v1132 = vadd.f32 0.0, %v1131
    %v1133 = vpop.f32.mrb[0].mxu0
    %v1134 = vpop.f32.mrb[0].mxu0
    %v1135 = vadd.f32 0.0, %v1134
    %v1136 = vpop.f32.mrb[0].mxu0
    %1137 = vdwg.mxu0
    %v1138 = vpack.c.bf16 %v1079, %v1076
    %v1139 = vpack.c.bf16 %v1087, %v1084
    %v1140 = vpack.c.bf16 %v1095, %v1092
    %v1141 = vpack.c.bf16 %v1103, %v1100
    %v1142 = vpack.c.bf16 %v1111, %v1108
    %v1143 = vpack.c.bf16 %v1119, %v1116
    %v1144 = vpack.c.bf16 %v1127, %v1124
    %v1145 = vpack.c.bf16 %v1135, %v1132
    %v1147 = vlaneseq
    %v1148 = vshrl.u32 %v1147, 7
    %v1149 = vsub.s32 0, %v1148
    %v1150 = vrot.slane %v992, %v1149
    %1152 = vmatprep.subr.bf16.mxu0 0
    %1153 = vmatpush1.bf16.msra.mxu0 %v1138
    %1154 = vmatprep.subr.bf16.mxu0 0
    %1155 = vmatpush1.bf16.msra.mxu0 %v1139
    %1156 = vmatprep.subr.bf16.mxu0 0
    %1157 = vmatpush1.bf16.msra.mxu0 %v1140
    %1158 = vmatprep.subr.bf16.mxu0 0
    %1159 = vmatpush1.bf16.msra.mxu0 %v1141
    %1160 = vmatprep.subr.bf16.mxu0 0
    %1161 = vmatpush1.bf16.msra.mxu0 %v1142
    %1162 = vmatprep.subr.bf16.mxu0 0
    %1163 = vmatpush1.bf16.msra.mxu0 %v1143
    %1164 = vmatprep.subr.bf16.mxu0 0
    %1165 = vmatpush1.bf16.msra.mxu0 %v1144
    %1166 = vmatprep.subr.bf16.mxu0 0
    %1167 = vmatpush1.bf16.msra.mxu0 %v1145
    %1168 = vmatprep.subr.bf16.mxu0 0
    %1169 = vmatpush1.bf16.msra.mxu0 0
    %1170 = vmatprep.subr.bf16.mxu0 0
    %1171 = vmatpush1.bf16.msra.mxu0 0
    %1172 = vmatprep.subr.bf16.mxu0 0
    %1173 = vmatpush1.bf16.msra.mxu0 0
    %1174 = vmatprep.subr.bf16.mxu0 0
    %1175 = vmatpush1.bf16.msra.mxu0 0
    %1176 = vmatprep.subr.bf16.mxu0 0
    %1177 = vmatpush1.bf16.msra.mxu0 0
    %1178 = vmatprep.subr.bf16.mxu0 0
    %1179 = vmatpush1.bf16.msra.mxu0 0
    %1180 = vmatprep.subr.bf16.mxu0 0
    %1181 = vmatpush1.bf16.msra.mxu0 0
    %1182 = vmatprep.subr.bf16.mxu0 0
    %1183 = vmatpush1.bf16.msra.mxu0 0
    %1184 = vmatprep.mubr.bf16.mxu0 0
    %1185 = vmatmul.mubr.bf16.gmra.mrb[0].mxu0 %v839
    %v1186 = vpop.f32.mrb[0].mxu0
    %v1187 = vadd.f32 %v1150, %v1186
    %v1188 = vpop.f32.mrb[0].mxu0
    %v1189 = vpop.f32.mrb[0].mxu0
    %v1190 = vadd.f32 %v1150, %v1189
    %v1191 = vpop.f32.mrb[0].mxu0
    %1192 = vmatprep.mubr.bf16.mxu0 0
    %1193 = vmatmul.mubr.bf16.gmra.mrb[0].mxu0 %v840
    %v1194 = vpop.f32.mrb[0].mxu0
    %v1195 = vadd.f32 %v1150, %v1194
    %v1196 = vpop.f32.mrb[0].mxu0
    %v1197 = vpop.f32.mrb[0].mxu0
    %v1198 = vadd.f32 %v1150, %v1197
    %v1199 = vpop.f32.mrb[0].mxu0
    %1200 = vmatprep.mubr.bf16.mxu0 0
    %1201 = vmatmul.mubr.bf16.gmra.mrb[0].mxu0 %v841
    %v1202 = vpop.f32.mrb[0].mxu0
    %v1203 = vadd.f32 %v1150, %v1202
    %v1204 = vpop.f32.mrb[0].mxu0
    %v1205 = vpop.f32.mrb[0].mxu0
    %v1206 = vadd.f32 %v1150, %v1205
    %v1207 = vpop.f32.mrb[0].mxu0
    %1208 = vmatprep.mubr.bf16.mxu0 0
    %1209 = vmatmul.mubr.bf16.gmra.mrb[0].mxu0 %v842
    %v1210 = vpop.f32.mrb[0].mxu0
    %v1211 = vadd.f32 %v1150, %v1210
    %v1212 = vpop.f32.mrb[0].mxu0
    %v1213 = vpop.f32.mrb[0].mxu0
    %v1214 = vadd.f32 %v1150, %v1213
    %v1215 = vpop.f32.mrb[0].mxu0
    %1216 = vmatprep.mubr.bf16.mxu0 0
    %1217 = vmatmul.mubr.bf16.gmra.mrb[0].mxu0 %v843
    %v1218 = vpop.f32.mrb[0].mxu0
    %v1219 = vadd.f32 %v1150, %v1218
    %v1220 = vpop.f32.mrb[0].mxu0
    %v1221 = vpop.f32.mrb[0].mxu0
    %v1222 = vadd.f32 %v1150, %v1221
    %v1223 = vpop.f32.mrb[0].mxu0
    %1224 = vmatprep.mubr.bf16.mxu0 0
    %1225 = vmatmul.mubr.bf16.gmra.mrb[0].mxu0 %v844
    %v1226 = vpop.f32.mrb[0].mxu0
    %v1227 = vadd.f32 %v1150, %v1226
    %v1228 = vpop.f32.mrb[0].mxu0
    %v1229 = vpop.f32.mrb[0].mxu0
    %v1230 = vadd.f32 %v1150, %v1229
    %v1231 = vpop.f32.mrb[0].mxu0
    %1232 = vmatprep.mubr.bf16.mxu0 0
    %1233 = vmatmul.mubr.bf16.gmra.mrb[0].mxu0 %v845
    %v1234 = vpop.f32.mrb[0].mxu0
    %v1235 = vadd.f32 %v1150, %v1234
    %v1236 = vpop.f32.mrb[0].mxu0
    %v1237 = vpop.f32.mrb[0].mxu0
    %v1238 = vadd.f32 %v1150, %v1237
    %v1239 = vpop.f32.mrb[0].mxu0
    %1240 = vmatprep.mubr.bf16.mxu0 0
    %1241 = vmatmul.mubr.bf16.gmra.mrb[0].mxu0 %v846
    %v1242 = vpop.f32.mrb[0].mxu0
    %v1243 = vadd.f32 %v1150, %v1242
    %v1244 = vpop.f32.mrb[0].mxu0
    %v1245 = vpop.f32.mrb[0].mxu0
    %v1246 = vadd.f32 %v1150, %v1245
    %v1247 = vpop.f32.mrb[0].mxu0
    %1248 = vdwg.mxu0
    %1249 = vst [vmem:[#allocation18] sm:$0xff] %v1187
    %1250 = vst [vmem:[#allocation18 + $0x8] sm:$0xff] %v1190
    %1251 = vst [vmem:[#allocation18 + $0x10] sm:$0xff] %v1195
    %1252 = vst [vmem:[#allocation18 + $0x18] sm:$0xff] %v1198
    %1253 = vst [vmem:[#allocation18 + $0x20] sm:$0xff] %v1203
    %1254 = vst [vmem:[#allocation18 + $0x28] sm:$0xff] %v1206
    %1255 = vst [vmem:[#allocation18 + $0x30] sm:$0xff] %v1211
    %1256 = vst [vmem:[#allocation18 + $0x38] sm:$0xff] %v1214
    %1257 = vst [vmem:[#allocation18 + $0x40] sm:$0xff] %v1219
    %1258 = vst [vmem:[#allocation18 + $0x48] sm:$0xff] %v1222
    %1259 = vst [vmem:[#allocation18 + $0x50] sm:$0xff] %v1227
    %1260 = vst [vmem:[#allocation18 + $0x58] sm:$0xff] %v1230
    %1261 = vst [vmem:[#allocation18 + $0x60] sm:$0xff] %v1235
    %1262 = vst [vmem:[#allocation18 + $0x68] sm:$0xff] %v1238
    %1263 = vst [vmem:[#allocation18 + $0x70] sm:$0xff] %v1243
    %1264 = vst [vmem:[#allocation18 + $0x78] sm:$0xff] %v1246
    %v1265 = vadd.f32 %v553, %v1187
    %v1266 = vadd.f32 %v556, %v1190
    %v1267 = vadd.f32 %v561, %v1195
    %v1268 = vadd.f32 %v564, %v1198
    %v1269 = vadd.f32 %v569, %v1203
    %v1270 = vadd.f32 %v572, %v1206
    %v1271 = vadd.f32 %v577, %v1211
    %v1272 = vadd.f32 %v580, %v1214
    %v1273 = vadd.f32 %v585, %v1219
    %v1274 = vadd.f32 %v588, %v1222
    %v1275 = vadd.f32 %v593, %v1227
    %v1276 = vadd.f32 %v596, %v1230
    %v1277 = vadd.f32 %v601, %v1235
    %v1278 = vadd.f32 %v604, %v1238
    %v1279 = vadd.f32 %v609, %v1243
    %v1280 = vadd.f32 %v612, %v1246
    %v1281 = vpack.c.bf16 %v1266, %v1265
    %v1282 = vpack.c.bf16 %v1268, %v1267
    %v1283 = vpack.c.bf16 %v1270, %v1269
    %v1284 = vpack.c.bf16 %v1272, %v1271
    %v1285 = vpack.c.bf16 %v1274, %v1273
    %v1286 = vpack.c.bf16 %v1276, %v1275
    %v1287 = vpack.c.bf16 %v1278, %v1277
    %v1288 = vpack.c.bf16 %v1280, %v1279
    %v1289 = vld [vmem:[#allocation13] sm:$0xf]
    %v1290 = vld [vmem:[#allocation13 + $0x4] sm:$0xf]
    %v1291 = vld [vmem:[#allocation13 + $0x8] sm:$0xf]
    %v1292 = vld [vmem:[#allocation13 + $0xc] sm:$0xf]
    %v1293 = vld [vmem:[#allocation13 + $0x10] sm:$0xf]
    %v1294 = vld [vmem:[#allocation13 + $0x14] sm:$0xf]
    %v1295 = vld [vmem:[#allocation13 + $0x18] sm:$0xf]
    %v1296 = vld [vmem:[#allocation13 + $0x1c] sm:$0xf]
    %v1297 = vld [vmem:[#allocation13 + $0x20] sm:$0xf]
    %v1298 = vld [vmem:[#allocation13 + $0x24] sm:$0xf]
    %v1299 = vld [vmem:[#allocation13 + $0x28] sm:$0xf]
    %v1300 = vld [vmem:[#allocation13 + $0x2c] sm:$0xf]
    %v1301 = vld [vmem:[#allocation13 + $0x30] sm:$0xf]
    %v1302 = vld [vmem:[#allocation13 + $0x34] sm:$0xf]
    %v1303 = vld [vmem:[#allocation13 + $0x38] sm:$0xf]
    %v1304 = vld [vmem:[#allocation13 + $0x3c] sm:$0xf]
    %v1305 = vld [vmem:[#allocation14] sm:$0x1]
    %v1307 = vlaneseq
    %v1308 = vshrl.u32 %v1307, 7
    %v1309 = vsub.s32 0, %v1308
    %v1310 = vrot.slane %v1305, %v1309
    %v1328 = vunpack.c.l.b16 %v1289
    %v1329 = vunpack.c.l.b16 %v1290
    %v1330 = vunpack.c.l.b16 %v1291
    %v1331 = vunpack.c.l.b16 %v1292
    %v1332 = vunpack.c.l.b16 %v1293
    %v1333 = vunpack.c.l.b16 %v1294
    %v1334 = vunpack.c.l.b16 %v1295
    %v1335 = vunpack.c.l.b16 %v1296
    %v1336 = vunpack.c.l.b16 %v1297
    %v1337 = vunpack.c.l.b16 %v1298
    %v1338 = vunpack.c.l.b16 %v1299
    %v1339 = vunpack.c.l.b16 %v1300
    %v1340 = vunpack.c.l.b16 %v1301
    %v1341 = vunpack.c.l.b16 %v1302
    %v1342 = vunpack.c.l.b16 %v1303
    %v1343 = vunpack.c.l.b16 %v1304
    %v1344 = vpack.c.b16 %v1329, %v1328
    %v1345 = vpack.c.b16 %v1331, %v1330
    %v1346 = vpack.c.b16 %v1333, %v1332
    %v1347 = vpack.c.b16 %v1335, %v1334
    %v1348 = vpack.c.b16 %v1337, %v1336
    %v1349 = vpack.c.b16 %v1339, %v1338
    %v1350 = vpack.c.b16 %v1341, %v1340
    %v1351 = vpack.c.b16 %v1343, %v1342
    %1360 = vmatprep.subr.bf16.mxu0 0
    %1361 = vmatpush1.bf16.msra.mxu0 %v1344
    %1362 = vmatprep.subr.bf16.mxu0 0
    %1363 = vmatpush1.bf16.msra.mxu0 %v1345
    %1364 = vmatprep.subr.bf16.mxu0 0
    %1365 = vmatpush1.bf16.msra.mxu0 %v1346
    %1366 = vmatprep.subr.bf16.mxu0 0
    %1367 = vmatpush1.bf16.msra.mxu0 %v1347
    %1368 = vmatprep.subr.bf16.mxu0 0
    %1369 = vmatpush1.bf16.msra.mxu0 %v1348
    %1370 = vmatprep.subr.bf16.mxu0 0
    %1371 = vmatpush1.bf16.msra.mxu0 %v1349
    %1372 = vmatprep.subr.bf16.mxu0 0
    %1373 = vmatpush1.bf16.msra.mxu0 %v1350
    %1374 = vmatprep.subr.bf16.mxu0 0
    %1375 = vmatpush1.bf16.msra.mxu0 %v1351
    %1376 = vmatprep.subr.bf16.mxu0 0
    %1377 = vmatpush1.bf16.msra.mxu0 0
    %1378 = vmatprep.subr.bf16.mxu0 0
    %1379 = vmatpush1.bf16.msra.mxu0 0
    %1380 = vmatprep.subr.bf16.mxu0 0
    %1381 = vmatpush1.bf16.msra.mxu0 0
    %1382 = vmatprep.subr.bf16.mxu0 0
    %1383 = vmatpush1.bf16.msra.mxu0 0
    %1384 = vmatprep.subr.bf16.mxu0 0
    %1385 = vmatpush1.bf16.msra.mxu0 0
    %1386 = vmatprep.subr.bf16.mxu0 0
    %1387 = vmatpush1.bf16.msra.mxu0 0
    %1388 = vmatprep.subr.bf16.mxu0 0
    %1389 = vmatpush1.bf16.msra.mxu0 0
    %1390 = vmatprep.subr.bf16.mxu0 0
    %1391 = vmatpush1.bf16.msra.mxu0 0
    %1392 = vmatprep.mubr.bf16.mxu0 0
    %1393 = vmatmul.mubr.bf16.gmra.mrb[0].mxu0 %v1281
    %v1394 = vpop.f32.mrb[0].mxu0
    %v1395 = vadd.f32 %v1310, %v1394
    %v1396 = vpop.f32.mrb[0].mxu0
    %v1397 = vpop.f32.mrb[0].mxu0
    %v1398 = vadd.f32 %v1310, %v1397
    %v1399 = vpop.f32.mrb[0].mxu0
    %1400 = vmatprep.mubr.bf16.mxu0 0
    %1401 = vmatmul.mubr.bf16.gmra.mrb[0].mxu0 %v1282
    %v1402 = vpop.f32.mrb[0].mxu0
    %v1403 = vadd.f32 %v1310, %v1402
    %v1404 = vpop.f32.mrb[0].mxu0
    %v1405 = vpop.f32.mrb[0].mxu0
    %v1406 = vadd.f32 %v1310, %v1405
    %v1407 = vpop.f32.mrb[0].mxu0
    %1408 = vmatprep.mubr.bf16.mxu0 0
    %1409 = vmatmul.mubr.bf16.gmra.mrb[0].mxu0 %v1283
    %v1410 = vpop.f32.mrb[0].mxu0
    %v1411 = vadd.f32 %v1310, %v1410
    %v1412 = vpop.f32.mrb[0].mxu0
    %v1413 = vpop.f32.mrb[0].mxu0
    %v1414 = vadd.f32 %v1310, %v1413
    %v1415 = vpop.f32.mrb[0].mxu0
    %1416 = vmatprep.mubr.bf16.mxu0 0
    %1417 = vmatmul.mubr.bf16.gmra.mrb[0].mxu0 %v1284
    %v1418 = vpop.f32.mrb[0].mxu0
    %v1419 = vadd.f32 %v1310, %v1418
    %v1420 = vpop.f32.mrb[0].mxu0
    %v1421 = vpop.f32.mrb[0].mxu0
    %v1422 = vadd.f32 %v1310, %v1421
    %v1423 = vpop.f32.mrb[0].mxu0
    %1424 = vmatprep.mubr.bf16.mxu0 0
    %1425 = vmatmul.mubr.bf16.gmra.mrb[0].mxu0 %v1285
    %v1426 = vpop.f32.mrb[0].mxu0
    %v1427 = vadd.f32 %v1310, %v1426
    %v1428 = vpop.f32.mrb[0].mxu0
    %v1429 = vpop.f32.mrb[0].mxu0
    %v1430 = vadd.f32 %v1310, %v1429
    %v1431 = vpop.f32.mrb[0].mxu0
    %1432 = vmatprep.mubr.bf16.mxu0 0
    %1433 = vmatmul.mubr.bf16.gmra.mrb[0].mxu0 %v1286
    %v1434 = vpop.f32.mrb[0].mxu0
    %v1435 = vadd.f32 %v1310, %v1434
    %v1436 = vpop.f32.mrb[0].mxu0
    %v1437 = vpop.f32.mrb[0].mxu0
    %v1438 = vadd.f32 %v1310, %v1437
    %v1439 = vpop.f32.mrb[0].mxu0
    %1440 = vmatprep.mubr.bf16.mxu0 0
    %1441 = vmatmul.mubr.bf16.gmra.mrb[0].mxu0 %v1287
    %v1442 = vpop.f32.mrb[0].mxu0
    %v1443 = vadd.f32 %v1310, %v1442
    %v1444 = vpop.f32.mrb[0].mxu0
    %v1445 = vpop.f32.mrb[0].mxu0
    %v1446 = vadd.f32 %v1310, %v1445
    %v1447 = vpop.f32.mrb[0].mxu0
    %1448 = vmatprep.mubr.bf16.mxu0 0
    %1449 = vmatmul.mubr.bf16.gmra.mrb[0].mxu0 %v1288
    %v1450 = vpop.f32.mrb[0].mxu0
    %v1451 = vadd.f32 %v1310, %v1450
    %v1452 = vpop.f32.mrb[0].mxu0
    %v1453 = vpop.f32.mrb[0].mxu0
    %v1454 = vadd.f32 %v1310, %v1453
    %v1455 = vpop.f32.mrb[0].mxu0
    %1456 = vdwg.mxu0
    %v1457 = vmax.f32 %v1395, 0.0
    %v1458 = vmax.f32 %v1398, 0.0
    %v1459 = vmax.f32 %v1403, 0.0
    %v1460 = vmax.f32 %v1406, 0.0
    %v1461 = vmax.f32 %v1411, 0.0
    %v1462 = vmax.f32 %v1414, 0.0
    %v1463 = vmax.f32 %v1419, 0.0
    %v1464 = vmax.f32 %v1422, 0.0
    %v1465 = vmax.f32 %v1427, 0.0
    %v1466 = vmax.f32 %v1430, 0.0
    %v1467 = vmax.f32 %v1435, 0.0
    %v1468 = vmax.f32 %v1438, 0.0
    %v1469 = vmax.f32 %v1443, 0.0
    %v1470 = vmax.f32 %v1446, 0.0
    %v1471 = vmax.f32 %v1451, 0.0
    %v1472 = vmax.f32 %v1454, 0.0
    %v1473 = vpack.c.bf16 %v1458, %v1457
    %v1474 = vpack.c.bf16 %v1460, %v1459
    %v1475 = vpack.c.bf16 %v1462, %v1461
    %v1476 = vpack.c.bf16 %v1464, %v1463
    %v1477 = vpack.c.bf16 %v1466, %v1465
    %v1478 = vpack.c.bf16 %v1468, %v1467
    %v1479 = vpack.c.bf16 %v1470, %v1469
    %v1480 = vpack.c.bf16 %v1472, %v1471
    %v1481 = vld [vmem:[#allocation16] sm:$0xf]
    %v1482 = vld [vmem:[#allocation16 + $0x4] sm:$0xf]
    %v1483 = vld [vmem:[#allocation16 + $0x8] sm:$0xf]
    %v1484 = vld [vmem:[#allocation16 + $0xc] sm:$0xf]
    %v1485 = vld [vmem:[#allocation16 + $0x10] sm:$0xf]
    %v1486 = vld [vmem:[#allocation16 + $0x14] sm:$0xf]
    %v1487 = vld [vmem:[#allocation16 + $0x18] sm:$0xf]
    %v1488 = vld [vmem:[#allocation16 + $0x1c] sm:$0xf]
    %v1489 = vld [vmem:[#allocation16 + $0x20] sm:$0xf]
    %v1490 = vld [vmem:[#allocation16 + $0x24] sm:$0xf]
    %v1491 = vld [vmem:[#allocation16 + $0x28] sm:$0xf]
    %v1492 = vld [vmem:[#allocation16 + $0x2c] sm:$0xf]
    %v1493 = vld [vmem:[#allocation16 + $0x30] sm:$0xf]
    %v1494 = vld [vmem:[#allocation16 + $0x34] sm:$0xf]
    %v1495 = vld [vmem:[#allocation16 + $0x38] sm:$0xf]
    %v1496 = vld [vmem:[#allocation16 + $0x3c] sm:$0xf]
    %v1497 = vld [vmem:[%s13] sm:$0x1]
    %v1499 = vlaneseq
    %v1500 = vshrl.u32 %v1499, 7
    %v1501 = vsub.s32 0, %v1500
    %v1502 = vrot.slane %v1497, %v1501
    %v1520 = vunpack.c.l.b16 %v1481
    %v1521 = vunpack.c.l.b16 %v1482
    %v1522 = vunpack.c.l.b16 %v1483
    %v1523 = vunpack.c.l.b16 %v1484
    %v1524 = vunpack.c.l.b16 %v1485
    %v1525 = vunpack.c.l.b16 %v1486
    %v1526 = vunpack.c.l.b16 %v1487
    %v1527 = vunpack.c.l.b16 %v1488
    %v1528 = vunpack.c.l.b16 %v1489
    %v1529 = vunpack.c.l.b16 %v1490
    %v1530 = vunpack.c.l.b16 %v1491
    %v1531 = vunpack.c.l.b16 %v1492
    %v1532 = vunpack.c.l.b16 %v1493
    %v1533 = vunpack.c.l.b16 %v1494
    %v1534 = vunpack.c.l.b16 %v1495
    %v1535 = vunpack.c.l.b16 %v1496
    %v1536 = vpack.c.b16 %v1521, %v1520
    %v1537 = vpack.c.b16 %v1523, %v1522
    %v1538 = vpack.c.b16 %v1525, %v1524
    %v1539 = vpack.c.b16 %v1527, %v1526
    %v1540 = vpack.c.b16 %v1529, %v1528
    %v1541 = vpack.c.b16 %v1531, %v1530
    %v1542 = vpack.c.b16 %v1533, %v1532
    %v1543 = vpack.c.b16 %v1535, %v1534
    %1552 = vmatprep.subr.bf16.mxu0 0
    %1553 = vmatpush1.bf16.msra.mxu0 %v1536
    %1554 = vmatprep.subr.bf16.mxu0 0
    %1555 = vmatpush1.bf16.msra.mxu0 %v1537
    %1556 = vmatprep.subr.bf16.mxu0 0
    %1557 = vmatpush1.bf16.msra.mxu0 %v1538
    %1558 = vmatprep.subr.bf16.mxu0 0
    %1559 = vmatpush1.bf16.msra.mxu0 %v1539
    %1560 = vmatprep.subr.bf16.mxu0 0
    %1561 = vmatpush1.bf16.msra.mxu0 %v1540
    %1562 = vmatprep.subr.bf16.mxu0 0
    %1563 = vmatpush1.bf16.msra.mxu0 %v1541
    %1564 = vmatprep.subr.bf16.mxu0 0
    %1565 = vmatpush1.bf16.msra.mxu0 %v1542
    %1566 = vmatprep.subr.bf16.mxu0 0
    %1567 = vmatpush1.bf16.msra.mxu0 %v1543
    %1568 = vmatprep.subr.bf16.mxu0 0
    %1569 = vmatpush1.bf16.msra.mxu0 0
    %1570 = vmatprep.subr.bf16.mxu0 0
    %1571 = vmatpush1.bf16.msra.mxu0 0
    %1572 = vmatprep.subr.bf16.mxu0 0
    %1573 = vmatpush1.bf16.msra.mxu0 0
    %1574 = vmatprep.subr.bf16.mxu0 0
    %1575 = vmatpush1.bf16.msra.mxu0 0
    %1576 = vmatprep.subr.bf16.mxu0 0
    %1577 = vmatpush1.bf16.msra.mxu0 0
    %1578 = vmatprep.subr.bf16.mxu0 0
    %1579 = vmatpush1.bf16.msra.mxu0 0
    %1580 = vmatprep.subr.bf16.mxu0 0
    %1581 = vmatpush1.bf16.msra.mxu0 0
    %1582 = vmatprep.subr.bf16.mxu0 0
    %1583 = vmatpush1.bf16.msra.mxu0 0
    %1584 = vmatprep.mubr.bf16.mxu0 0
    %1585 = vmatmul.mubr.bf16.gmra.mrb[0].mxu0 %v1473
    %v1586 = vpop.f32.mrb[0].mxu0
    %v1587 = vadd.f32 %v1502, %v1586
    %v1588 = vpop.f32.mrb[0].mxu0
    %v1589 = vpop.f32.mrb[0].mxu0
    %v1590 = vadd.f32 %v1502, %v1589
    %v1591 = vpop.f32.mrb[0].mxu0
    %1592 = vmatprep.mubr.bf16.mxu0 0
    %1593 = vmatmul.mubr.bf16.gmra.mrb[0].mxu0 %v1474
    %v1594 = vpop.f32.mrb[0].mxu0
    %v1595 = vadd.f32 %v1502, %v1594
    %v1596 = vpop.f32.mrb[0].mxu0
    %v1597 = vpop.f32.mrb[0].mxu0
    %v1598 = vadd.f32 %v1502, %v1597
    %v1599 = vpop.f32.mrb[0].mxu0
    %1600 = vmatprep.mubr.bf16.mxu0 0
    %1601 = vmatmul.mubr.bf16.gmra.mrb[0].mxu0 %v1475
    %v1602 = vpop.f32.mrb[0].mxu0
    %v1603 = vadd.f32 %v1502, %v1602
    %v1604 = vpop.f32.mrb[0].mxu0
    %v1605 = vpop.f32.mrb[0].mxu0
    %v1606 = vadd.f32 %v1502, %v1605
    %v1607 = vpop.f32.mrb[0].mxu0
    %1608 = vmatprep.mubr.bf16.mxu0 0
    %1609 = vmatmul.mubr.bf16.gmra.mrb[0].mxu0 %v1476
    %v1610 = vpop.f32.mrb[0].mxu0
    %v1611 = vadd.f32 %v1502, %v1610
    %v1612 = vpop.f32.mrb[0].mxu0
    %v1613 = vpop.f32.mrb[0].mxu0
    %v1614 = vadd.f32 %v1502, %v1613
    %v1615 = vpop.f32.mrb[0].mxu0
    %1616 = vmatprep.mubr.bf16.mxu0 0
    %1617 = vmatmul.mubr.bf16.gmra.mrb[0].mxu0 %v1477
    %v1618 = vpop.f32.mrb[0].mxu0
    %v1619 = vadd.f32 %v1502, %v1618
    %v1620 = vpop.f32.mrb[0].mxu0
    %v1621 = vpop.f32.mrb[0].mxu0
    %v1622 = vadd.f32 %v1502, %v1621
    %v1623 = vpop.f32.mrb[0].mxu0
    %1624 = vmatprep.mubr.bf16.mxu0 0
    %1625 = vmatmul.mubr.bf16.gmra.mrb[0].mxu0 %v1478
    %v1626 = vpop.f32.mrb[0].mxu0
    %v1627 = vadd.f32 %v1502, %v1626
    %v1628 = vpop.f32.mrb[0].mxu0
    %v1629 = vpop.f32.mrb[0].mxu0
    %v1630 = vadd.f32 %v1502, %v1629
    %v1631 = vpop.f32.mrb[0].mxu0
    %1632 = vmatprep.mubr.bf16.mxu0 0
    %1633 = vmatmul.mubr.bf16.gmra.mrb[0].mxu0 %v1479
    %v1634 = vpop.f32.mrb[0].mxu0
    %v1635 = vadd.f32 %v1502, %v1634
    %v1636 = vpop.f32.mrb[0].mxu0
    %v1637 = vpop.f32.mrb[0].mxu0
    %v1638 = vadd.f32 %v1502, %v1637
    %v1639 = vpop.f32.mrb[0].mxu0
    %1640 = vmatprep.mubr.bf16.mxu0 0
    %1641 = vmatmul.mubr.bf16.gmra.mrb[0].mxu0 %v1480
    %v1642 = vpop.f32.mrb[0].mxu0
    %v1643 = vadd.f32 %v1502, %v1642
    %v1644 = vpop.f32.mrb[0].mxu0
    %v1645 = vpop.f32.mrb[0].mxu0
    %v1646 = vadd.f32 %v1502, %v1645
    %v1647 = vpop.f32.mrb[0].mxu0
    %1648 = vdwg.mxu0
    %1649 = vst [vmem:[#allocation20] sm:$0xff] %v1587
    %1650 = vst [vmem:[#allocation20 + $0x8] sm:$0xff] %v1590
    %1651 = vst [vmem:[#allocation20 + $0x10] sm:$0xff] %v1595
    %1652 = vst [vmem:[#allocation20 + $0x18] sm:$0xff] %v1598
    %1653 = vst [vmem:[#allocation20 + $0x20] sm:$0xff] %v1603
    %1654 = vst [vmem:[#allocation20 + $0x28] sm:$0xff] %v1606
    %1655 = vst [vmem:[#allocation20 + $0x30] sm:$0xff] %v1611
    %1656 = vst [vmem:[#allocation20 + $0x38] sm:$0xff] %v1614
    %1657 = vst [vmem:[#allocation20 + $0x40] sm:$0xff] %v1619
    %1658 = vst [vmem:[#allocation20 + $0x48] sm:$0xff] %v1622
    %1659 = vst [vmem:[#allocation20 + $0x50] sm:$0xff] %v1627
    %1660 = vst [vmem:[#allocation20 + $0x58] sm:$0xff] %v1630
    %1661 = vst [vmem:[#allocation20 + $0x60] sm:$0xff] %v1635
    %1662 = vst [vmem:[#allocation20 + $0x68] sm:$0xff] %v1638
    %1663 = vst [vmem:[#allocation20 + $0x70] sm:$0xff] %v1643
    %1664 = vst [vmem:[#allocation20 + $0x78] sm:$0xff] %v1646
    %v1665 = vpack.c.bf16 %v1190, %v1187
    %v1666 = vpack.c.bf16 %v1198, %v1195
    %v1667 = vpack.c.bf16 %v1206, %v1203
    %v1668 = vpack.c.bf16 %v1214, %v1211
    %v1669 = vpack.c.bf16 %v1222, %v1219
    %v1670 = vpack.c.bf16 %v1230, %v1227
    %v1671 = vpack.c.bf16 %v1238, %v1235
    %v1672 = vpack.c.bf16 %v1246, %v1243
    %1673 = vmatprep.subr.bf16.mxu0 0
    %1674 = vmatpush1.bf16.xpose.msra.mxu0 %v1665
    %1675 = vmatprep.subr.bf16.mxu0 0
    %1676 = vmatpush1.bf16.xpose.msra.mxu0 %v1666
    %1677 = vmatprep.subr.bf16.mxu0 0
    %1678 = vmatpush1.bf16.xpose.msra.mxu0 %v1667
    %1679 = vmatprep.subr.bf16.mxu0 0
    %1680 = vmatpush1.bf16.xpose.msra.mxu0 %v1668
    %1681 = vmatprep.subr.bf16.mxu0 0
    %1682 = vmatpush1.bf16.xpose.msra.mxu0 %v1669
    %1683 = vmatprep.subr.bf16.mxu0 0
    %1684 = vmatpush1.bf16.xpose.msra.mxu0 %v1670
    %1685 = vmatprep.subr.bf16.mxu0 0
    %1686 = vmatpush1.bf16.xpose.msra.mxu0 %v1671
    %1687 = vmatprep.subr.bf16.mxu0 0
    %1688 = vmatpush1.bf16.xpose.msra.mxu0 %v1672
    %1689 = vmatprep.subr.bf16.mxu0 0
    %1690 = vmatpush1.bf16.xpose.msra.mxu0 0
    %1691 = vmatprep.subr.bf16.mxu0 0
    %1692 = vmatpush1.bf16.xpose.msra.mxu0 0
    %1693 = vmatprep.subr.bf16.mxu0 0
    %1694 = vmatpush1.bf16.xpose.msra.mxu0 0
    %1695 = vmatprep.subr.bf16.mxu0 0
    %1696 = vmatpush1.bf16.xpose.msra.mxu0 0
    %1697 = vmatprep.subr.bf16.mxu0 0
    %1698 = vmatpush1.bf16.xpose.msra.mxu0 0
    %1699 = vmatprep.subr.bf16.mxu0 0
    %1700 = vmatpush1.bf16.xpose.msra.mxu0 0
    %1701 = vmatprep.subr.bf16.mxu0 0
    %1702 = vmatpush1.bf16.xpose.msra.mxu0 0
    %1703 = vmatprep.subr.bf16.mxu0 0
    %1704 = vmatpush1.bf16.xpose.msra.mxu0 0
    %1705 = vmatprep.mubr.bf16.mxu0 0
    %1706 = vmatmul.mubr.bf16.gmra.mrb[0].mxu0 %v1665
    %v1707 = vpop.f32.mrb[0].mxu0
    %v1708 = vadd.f32 0.0, %v1707
    %v1709 = vpop.f32.mrb[0].mxu0
    %v1710 = vpop.f32.mrb[0].mxu0
    %v1711 = vadd.f32 0.0, %v1710
    %v1712 = vpop.f32.mrb[0].mxu0
    %1713 = vmatprep.mubr.bf16.mxu0 0
    %1714 = vmatmul.mubr.bf16.gmra.mrb[0].mxu0 %v1666
    %v1715 = vpop.f32.mrb[0].mxu0
    %v1716 = vadd.f32 0.0, %v1715
    %v1717 = vpop.f32.mrb[0].mxu0
    %v1718 = vpop.f32.mrb[0].mxu0
    %v1719 = vadd.f32 0.0, %v1718
    %v1720 = vpop.f32.mrb[0].mxu0
    %1721 = vmatprep.mubr.bf16.mxu0 0
    %1722 = vmatmul.mubr.bf16.gmra.mrb[0].mxu0 %v1667
    %v1723 = vpop.f32.mrb[0].mxu0
    %v1724 = vadd.f32 0.0, %v1723
    %v1725 = vpop.f32.mrb[0].mxu0
    %v1726 = vpop.f32.mrb[0].mxu0
    %v1727 = vadd.f32 0.0, %v1726
    %v1728 = vpop.f32.mrb[0].mxu0
    %1729 = vmatprep.mubr.bf16.mxu0 0
    %1730 = vmatmul.mubr.bf16.gmra.mrb[0].mxu0 %v1668
    %v1731 = vpop.f32.mrb[0].mxu0
    %v1732 = vadd.f32 0.0, %v1731
    %v1733 = vpop.f32.mrb[0].mxu0
    %v1734 = vpop.f32.mrb[0].mxu0
    %v1735 = vadd.f32 0.0, %v1734
    %v1736 = vpop.f32.mrb[0].mxu0
    %1737 = vmatprep.mubr.bf16.mxu0 0
    %1738 = vmatmul.mubr.bf16.gmra.mrb[0].mxu0 %v1669
    %v1739 = vpop.f32.mrb[0].mxu0
    %v1740 = vadd.f32 0.0, %v1739
    %v1741 = vpop.f32.mrb[0].mxu0
    %v1742 = vpop.f32.mrb[0].mxu0
    %v1743 = vadd.f32 0.0, %v1742
    %v1744 = vpop.f32.mrb[0].mxu0
    %1745 = vmatprep.mubr.bf16.mxu0 0
    %1746 = vmatmul.mubr.bf16.gmra.mrb[0].mxu0 %v1670
    %v1747 = vpop.f32.mrb[0].mxu0
    %v1748 = vadd.f32 0.0, %v1747
    %v1749 = vpop.f32.mrb[0].mxu0
    %v1750 = vpop.f32.mrb[0].mxu0
    %v1751 = vadd.f32 0.0, %v1750
    %v1752 = vpop.f32.mrb[0].mxu0
    %1753 = vmatprep.mubr.bf16.mxu0 0
    %1754 = vmatmul.mubr.bf16.gmra.mrb[0].mxu0 %v1671
    %v1755 = vpop.f32.mrb[0].mxu0
    %v1756 = vadd.f32 0.0, %v1755
    %v1757 = vpop.f32.mrb[0].mxu0
    %v1758 = vpop.f32.mrb[0].mxu0
    %v1759 = vadd.f32 0.0, %v1758
    %v1760 = vpop.f32.mrb[0].mxu0
    %1761 = vmatprep.mubr.bf16.mxu0 0
    %1762 = vmatmul.mubr.bf16.gmra.mrb[0].mxu0 %v1672
    %v1763 = vpop.f32.mrb[0].mxu0
    %v1764 = vadd.f32 0.0, %v1763
    %v1765 = vpop.f32.mrb[0].mxu0
    %v1766 = vpop.f32.mrb[0].mxu0
    %v1767 = vadd.f32 0.0, %v1766
    %v1768 = vpop.f32.mrb[0].mxu0
    %1769 = vdwg.mxu0
    %v1770 = vxor.u32 %v1708, 2147483648
    %v1771 = vxor.u32 %v1711, 2147483648
    %v1772 = vxor.u32 %v1716, 2147483648
    %v1773 = vxor.u32 %v1719, 2147483648
    %v1774 = vxor.u32 %v1724, 2147483648
    %v1775 = vxor.u32 %v1727, 2147483648
    %v1776 = vxor.u32 %v1732, 2147483648
    %v1777 = vxor.u32 %v1735, 2147483648
    %v1778 = vxor.u32 %v1740, 2147483648
    %v1779 = vxor.u32 %v1743, 2147483648
    %v1780 = vxor.u32 %v1748, 2147483648
    %v1781 = vxor.u32 %v1751, 2147483648
    %v1782 = vxor.u32 %v1756, 2147483648
    %v1783 = vxor.u32 %v1759, 2147483648
    %v1784 = vxor.u32 %v1764, 2147483648
    %v1785 = vxor.u32 %v1767, 2147483648
    %v1786 = vmul.f32 %v1770, 1.442695
    %v1787 = vpow.pop %v1786
    %v1788 = vmul.f32 %v1771, 1.442695
    %v1789 = vpow.pop %v1788
    %v1790 = vmul.f32 %v1772, 1.442695
    %v1791 = vpow.pop %v1790
    %v1792 = vmul.f32 %v1773, 1.442695
    %v1793 = vpow.pop %v1792
    %v1794 = vmul.f32 %v1774, 1.442695
    %v1795 = vpow.pop %v1794
    %v1796 = vmul.f32 %v1775, 1.442695
    %v1797 = vpow.pop %v1796
    %v1798 = vmul.f32 %v1776, 1.442695
    %v1799 = vpow.pop %v1798
    %v1800 = vmul.f32 %v1777, 1.442695
    %v1801 = vpow.pop %v1800
    %v1802 = vmul.f32 %v1778, 1.442695
    %v1803 = vpow.pop %v1802
    %v1804 = vmul.f32 %v1779, 1.442695
    %v1805 = vpow.pop %v1804
    %v1806 = vmul.f32 %v1780, 1.442695
    %v1807 = vpow.pop %v1806
    %v1808 = vmul.f32 %v1781, 1.442695
    %v1809 = vpow.pop %v1808
    %v1810 = vmul.f32 %v1782, 1.442695
    %v1811 = vpow.pop %v1810
    %v1812 = vmul.f32 %v1783, 1.442695
    %v1813 = vpow.pop %v1812
    %v1814 = vmul.f32 %v1784, 1.442695
    %v1815 = vpow.pop %v1814
    %v1816 = vmul.f32 %v1785, 1.442695
    %v1817 = vpow.pop %v1816
    %v1818 = vadd.f32 %v1787, 1.0
    %v1819 = vadd.f32 %v1789, 1.0
    %v1820 = vadd.f32 %v1791, 1.0
    %v1821 = vadd.f32 %v1793, 1.0
    %v1822 = vadd.f32 %v1795, 1.0
    %v1823 = vadd.f32 %v1797, 1.0
    %v1824 = vadd.f32 %v1799, 1.0
    %v1825 = vadd.f32 %v1801, 1.0
    %v1826 = vadd.f32 %v1803, 1.0
    %v1827 = vadd.f32 %v1805, 1.0
    %v1828 = vadd.f32 %v1807, 1.0
    %v1829 = vadd.f32 %v1809, 1.0
    %v1830 = vadd.f32 %v1811, 1.0
    %v1831 = vadd.f32 %v1813, 1.0
    %v1832 = vadd.f32 %v1815, 1.0
    %v1833 = vadd.f32 %v1817, 1.0
    %v1834 = vrcp.pop %v1818
    %v1835 = vmul.f32 1.0, %v1834
    %v1836 = vrcp.pop %v1819
    %v1837 = vmul.f32 1.0, %v1836
    %v1838 = vrcp.pop %v1820
    %v1839 = vmul.f32 1.0, %v1838
    %v1840 = vrcp.pop %v1821
    %v1841 = vmul.f32 1.0, %v1840
    %v1842 = vrcp.pop %v1822
    %v1843 = vmul.f32 1.0, %v1842
    %v1844 = vrcp.pop %v1823
    %v1845 = vmul.f32 1.0, %v1844
    %v1846 = vrcp.pop %v1824
    %v1847 = vmul.f32 1.0, %v1846
    %v1848 = vrcp.pop %v1825
    %v1849 = vmul.f32 1.0, %v1848
    %v1850 = vrcp.pop %v1826
    %v1851 = vmul.f32 1.0, %v1850
    %v1852 = vrcp.pop %v1827
    %v1853 = vmul.f32 1.0, %v1852
    %v1854 = vrcp.pop %v1828
    %v1855 = vmul.f32 1.0, %v1854
    %v1856 = vrcp.pop %v1829
    %v1857 = vmul.f32 1.0, %v1856
    %v1858 = vrcp.pop %v1830
    %v1859 = vmul.f32 1.0, %v1858
    %v1860 = vrcp.pop %v1831
    %v1861 = vmul.f32 1.0, %v1860
    %v1862 = vrcp.pop %v1832
    %v1863 = vmul.f32 1.0, %v1862
    %v1864 = vrcp.pop %v1833
    %v1865 = vmul.f32 1.0, %v1864
    %1866 = vst [vmem:[#allocation21] sm:$0xff] %v1835
    %1867 = vst [vmem:[#allocation21 + $0x8] sm:$0xff] %v1837
    %1868 = vst [vmem:[#allocation21 + $0x10] sm:$0xff] %v1839
    %1869 = vst [vmem:[#allocation21 + $0x18] sm:$0xff] %v1841
    %1870 = vst [vmem:[#allocation21 + $0x20] sm:$0xff] %v1843
    %1871 = vst [vmem:[#allocation21 + $0x28] sm:$0xff] %v1845
    %1872 = vst [vmem:[#allocation21 + $0x30] sm:$0xff] %v1847
    %1873 = vst [vmem:[#allocation21 + $0x38] sm:$0xff] %v1849
    %1874 = vst [vmem:[#allocation21 + $0x40] sm:$0xff] %v1851
    %1875 = vst [vmem:[#allocation21 + $0x48] sm:$0xff] %v1853
    %1876 = vst [vmem:[#allocation21 + $0x50] sm:$0xff] %v1855
    %1877 = vst [vmem:[#allocation21 + $0x58] sm:$0xff] %v1857
    %1878 = vst [vmem:[#allocation21 + $0x60] sm:$0xff] %v1859
    %1879 = vst [vmem:[#allocation21 + $0x68] sm:$0xff] %v1861
    %1880 = vst [vmem:[#allocation21 + $0x70] sm:$0xff] %v1863
    %1881 = vst [vmem:[#allocation21 + $0x78] sm:$0xff] %v1865
    // Predicated region
    $region94: #{svdae_forward_pallas.1} parent=1 // pred_check
      _
    $region95: #{svdae_forward_pallas.1} parent=1 // pred_check_branch
      %1883 = sbr.rel (0) target = $region97
    $region96: #{svdae_forward_pallas.1} parent=1 // pred_region
      %s1885 = ssub.s32 2048, 2048
      %1886 = vsyncadd [#allocation4], %s1885
      %s1887 = sshll.u32 [#allocation17], 4
      %s1888 = int_to_ptr.vmem [resolvable:$true] %s1887
      %1893 = dma.vmem_to_hbm [thread:$0]  %s1888, 2048, %s14, [#allocation4], 128, 128, 8
    $region97: #{svdae_forward_pallas.1} parent=1 // pred_fallthru
      _
    // Predicated region
    $region98: #{svdae_forward_pallas.1} parent=1 // pred_check
      _
    $region99: #{svdae_forward_pallas.1} parent=1 // pred_check_branch
      %1895 = sbr.rel (0) target = $region101
    $region100: #{svdae_forward_pallas.1} parent=1 // pred_region
      %s1897 = ssub.s32 2048, 2048
      %1898 = vsyncadd [#allocation19], %s1897
      %s1899 = sshll.u32 [#allocation18], 4
      %s1900 = int_to_ptr.vmem [resolvable:$true] %s1899
      %1905 = dma.vmem_to_hbm [thread:$0]  %s1900, 2048, %s15, [#allocation19], 128, 128, 8
    $region101: #{svdae_forward_pallas.1} parent=1 // pred_fallthru
      _
    // Predicated region
    $region102: #{svdae_forward_pallas.1} parent=1 // pred_check
      _
    $region103: #{svdae_forward_pallas.1} parent=1 // pred_check_branch
      %1907 = sbr.rel (0) target = $region105
    $region104: #{svdae_forward_pallas.1} parent=1 // pred_region
      %s1909 = ssub.s32 2048, 2048
      %1910 = vsyncadd [#allocation19], %s1909
      %s1911 = sshll.u32 [#allocation20], 4
      %s1912 = int_to_ptr.vmem [resolvable:$true] %s1911
      %1917 = dma.vmem_to_hbm [thread:$0]  %s1912, 2048, %s16, [#allocation19], 128, 128, 8
    $region105: #{svdae_forward_pallas.1} parent=1 // pred_fallthru
      _
    // Predicated region
    $region106: #{svdae_forward_pallas.1} parent=1 // pred_check
      _
    $region107: #{svdae_forward_pallas.1} parent=1 // pred_check_branch
      %1919 = sbr.rel (0) target = $region109
    $region108: #{svdae_forward_pallas.1} parent=1 // pred_region
      %s1921 = ssub.s32 2048, 2048
      %1922 = vsyncadd [#allocation22], %s1921
      %s1923 = sshll.u32 [#allocation21], 4
      %s1924 = int_to_ptr.vmem [resolvable:$true] %s1923
      %1929 = dma.vmem_to_hbm [thread:$0]  %s1924, 2048, %s17, [#allocation22], 128, 128, 8
    $region109: #{svdae_forward_pallas.1} parent=1 // pred_fallthru
      _
    // Predicated region
    $region110: #{svdae_forward_pallas.1} parent=1 // pred_check
      _
    $region111: #{svdae_forward_pallas.1} parent=1 // pred_check_branch
      %1931 = sbr.rel (0) target = $region113
    $region112: #{svdae_forward_pallas.1} parent=1 // pred_region
      %1932 = dma.done [#allocation4], 2048
    $region113: #{svdae_forward_pallas.1} parent=1 // pred_fallthru
      _
    // Predicated region
    $region114: #{svdae_forward_pallas.1} parent=1 // pred_check
      _
    $region115: #{svdae_forward_pallas.1} parent=1 // pred_check_branch
      %1934 = sbr.rel (0) target = $region117
    $region116: #{svdae_forward_pallas.1} parent=1 // pred_region
      %1935 = dma.done [#allocation19], 2048
    $region117: #{svdae_forward_pallas.1} parent=1 // pred_fallthru
      _
    // Predicated region
    $region118: #{svdae_forward_pallas.1} parent=1 // pred_check
      _
    $region119: #{svdae_forward_pallas.1} parent=1 // pred_check_branch
      %1937 = sbr.rel (0) target = $region121
    $region120: #{svdae_forward_pallas.1} parent=1 // pred_region
      %1938 = dma.done [#allocation19], 2048
    $region121: #{svdae_forward_pallas.1} parent=1 // pred_fallthru
      _
    // Predicated region
    $region122: #{svdae_forward_pallas.1} parent=1 // pred_check
      _
    $region123: #{svdae_forward_pallas.1} parent=1 // pred_check_branch
      %1940 = sbr.rel (0) target = $region125
    $region124: #{svdae_forward_pallas.1} parent=1 // pred_region
      %1941 = dma.done [#allocation22], 2048
    $region125: #{svdae_forward_pallas.1} parent=1 // pred_fallthru
      _
    %1942 = vsyncpa [#allocation3], 1
    %1943 = vsyncpa [#allocation6], 1
    %1944 = vsyncpa [#allocation9], 1
    %1945 = vsyncpa [#allocation12], 1
    %1946 = vsyncpa [#allocation15], 1
    %1947 = vsyncpa [#allocation4], 1
    %1948 = vsyncpa [#allocation19], 1
    %1949 = vsyncpa [#allocation22], 1

</llo_original>
